<compile_context>
chip_gen: v5e
topology: v5e:2x2
jax: 0.10.0
libtpu: 0.0.40
codegen_flags: <defaults>
</compile_context>

<pallas_src>
import functools

import jax
import jax.numpy as jnp
from jax import lax
from jax.experimental import pallas as pl
from jax.experimental.pallas import tpu as pltpu

HIDDEN_SIZE = 128
INPUT_SIZE = 2
NUM_ACTIONS = 2
HEAD_WIDTH = 128        # lane-dense fused head output width


def actor_critic_kernel(x_ref, wih_ref, b_ref, whh_ref, wheads_hbm, bheads_hbm,
                        h0_ref, c0_ref,
                        out_ref, hn_ref, cn_ref,
                        xg_ref, y_ref, wh_vmem, bh_vmem, dma_sem,
                        *, t_real, t_pad, hidden_size, num_actions, input_size):
    H = hidden_size
    A = num_actions

    # ---- Kick off head-weight DMA now; wait only after the recurrence so the
    # transfer is hidden behind the serial compute. ----
    wh_cp = pltpu.make_async_copy(wheads_hbm, wh_vmem, dma_sem.at[0])
    bh_cp = pltpu.make_async_copy(bheads_hbm, bh_vmem, dma_sem.at[1])
    wh_cp.start()
    bh_cp.start()

    # ---- Input projection on the VPU: contraction depth == input_size == 2 is
    # far too shallow for the MXU.  xg = sum_k x[:, k] * W_ih^T[k, :] + b. ----
    xg = jnp.broadcast_to(b_ref[...], (t_pad, 4 * H))
    for k in range(input_size):
        xg = xg + x_ref[:, k:k + 1] * wih_ref[k:k + 1, :]
    xg_ref[...] = xg                                             # (T_pad, 4H)

    # Zero only the statically-known padded tail rows of the post-relu buffer;
    # real rows are written by the recurrence below.
    if t_pad > t_real:
        y_ref[pl.ds(t_real, t_pad - t_real), :] = jnp.zeros(
            (t_pad - t_real, H), jnp.float32)

    def cell(t, h, c):
        # Recurrent matmul: bf16 operands, f32 accumulation.  whh_ref is read
        # inside the step (NOT hoisted across the loop: a live 128x512 f32
        # value would occupy the entire vreg file and spill).
        # TODO(synk): explicit MXU staging (matmul_push_rhs once, acc_lhs/pop
        # per step) to avoid re-streaming whh every timestep.
        gates = xg_ref[pl.ds(t, 1), :] + jnp.dot(
            h.astype(jnp.bfloat16), whh_ref[...],
            preferred_element_type=jnp.float32)                  # (1, 4H)

        # PyTorch LSTM gate ordering: i, f, g, o (static, 128-aligned slices).
        i_g = jax.nn.sigmoid(gates[:, 0:H])
        f_g = jax.nn.sigmoid(gates[:, H:2 * H])
        g_g = jnp.tanh(gates[:, 2 * H:3 * H])
        o_g = jax.nn.sigmoid(gates[:, 3 * H:4 * H])

        c_new = f_g * c + i_g * g_g
        h_new = o_g * jnp.tanh(c_new)
        return h_new, c_new

    n_full = t_real // 8            # static python ints
    rem = t_real - n_full * 8

    h = h0_ref[...]
    c = c0_ref[...]

    if n_full > 0:
        def chunk(ci, carry):
            h, c = carry
            base = pl.multiple_of(ci * 8, 8)
            rows = []
            for j in range(8):
                h, c = cell(base + j, h, c)
                rows.append(jnp.maximum(h, 0.0))                 # F.relu
            # One full, aligned (8, H) store per 8 steps instead of 8 masked
            # single-sublane stores.
            y_ref[pl.ds(base, 8), :] = jnp.concatenate(rows, axis=0)
            return h, c

        h, c = lax.fori_loop(0, n_full, chunk, (h, c))

    for j in range(rem):            # static remainder tail (< 8 steps)
        t = n_full * 8 + j
        h, c = cell(t, h, c)
        y_ref[t:t + 1, :] = jnp.maximum(h, 0.0)

    hn_ref[...] = h
    cn_ref[...] = c

    # ---- Fused heads after the loop: one (T_pad, H) @ (H, 128) matmul plus a
    # batched masked softmax.  cols [0, A) = policy, col A = value, rest 0. ----
    wh_cp.wait()
    bh_cp.wait()
    headm = (jnp.dot(y_ref[...], wh_vmem[...],
                     preferred_element_type=jnp.float32)
             + bh_vmem[...])                                     # (T_pad, 128)

    col = lax.broadcasted_iota(jnp.int32, headm.shape, 1)
    act_mask = col < A                                           # policy columns

    masked = jnp.where(act_mask, headm, jnp.float32(-1e30))
    m = jnp.max(masked, axis=-1, keepdims=True)
    e = jnp.where(act_mask, jnp.exp(masked - m), 0.0)
    pi_full = e / jnp.sum(e, axis=-1, keepdims=True)

    # cols [0, A): softmax policy; col A: raw value; cols > A stay zero because
    # wheads/bheads columns > A are zero-initialized in the wrapper.
    out_ref[...] = jnp.where(act_mask, pi_full, headm)


def init_params(key, input_size=INPUT_SIZE, hidden_size=HIDDEN_SIZE,
                num_actions=NUM_ACTIONS):
    """Deterministic synthetic parameters with PyTorch-style shapes."""
    ks = jax.random.split(key, 8)
    s = 1.0 / jnp.sqrt(hidden_size)
    return {
        "w_ih": jax.random.uniform(ks[0], (4 * hidden_size, input_size), jnp.float32, -s, s),
        "w_hh": jax.random.uniform(ks[1], (4 * hidden_size, hidden_size), jnp.float32, -s, s),
        "b_ih": jax.random.uniform(ks[2], (4 * hidden_size,), jnp.float32, -s, s),
        "b_hh": jax.random.uniform(ks[3], (4 * hidden_size,), jnp.float32, -s, s),
        "w_pi": jax.random.uniform(ks[4], (num_actions, hidden_size), jnp.float32, -s, s),
        "b_pi": jax.random.uniform(ks[5], (num_actions,), jnp.float32, -s, s),
        "w_v": jax.random.uniform(ks[6], (1, hidden_size), jnp.float32, -s, s),
        "b_v": jax.random.uniform(ks[7], (1,), jnp.float32, -s, s),
    }


@jax.jit
def actor_critic_forward(x, params, hidden=None):
    """x: any shape reshapable to (T, 1, input_size), like the PyTorch module."""
    H = HIDDEN_SIZE
    A = NUM_ACTIONS
    x2d = x.reshape(-1, INPUT_SIZE).astype(jnp.float32)    # x.view(-1, 1, input_size)
    T = x2d.shape[0]
    T_pad = max(8, ((T + 7) // 8) * 8)                     # sublane alignment
    if T_pad != T:
        x2d = jnp.pad(x2d, ((0, T_pad - T), (0, 0)))

    if hidden is None:
        h0 = jnp.zeros((1, H), jnp.float32)
        c0 = jnp.zeros((1, H), jnp.float32)
    else:
        h0 = hidden[0].reshape(1, H).astype(jnp.float32)
        c0 = hidden[1].reshape(1, H).astype(jnp.float32)

    # Pre-transpose LSTM weights; fold both biases.  Recurrent weight in bf16
    # (f32 accumulation in-kernel) halves its DMA/VMEM and cuts MXU passes.
    wih_t = params["w_ih"].T                               # (input_size, 4H) f32
    whh_bf16 = params["w_hh"].T.astype(jnp.bfloat16)       # (H, 4H) bf16
    b = (params["b_ih"] + params["b_hh"]).reshape(1, 4 * H)

    # Fused, lane-padded head weights: cols [0,A)=policy, col A=value, rest zero.
    wheads = jnp.zeros((H, HEAD_WIDTH), jnp.float32)
    wheads = wheads.at[:, :A].set(params["w_pi"].T)
    wheads = wheads.at[:, A:A + 1].set(params["w_v"].T)
    bheads = jnp.zeros((1, HEAD_WIDTH), jnp.float32)
    bheads = bheads.at[:, :A].set(params["b_pi"].reshape(1, A))
    bheads = bheads.at[:, A:A + 1].set(params["b_v"].reshape(1, 1))

    # Scoped-VMEM budget from the actual footprint (inputs + outputs + scratch),
    # with 2x headroom, floored at 32 MiB and capped at v7x's 64 MiB physical.
    approx_vmem = (
        x2d.size * 4 + wih_t.size * 4 + b.size * 4 + whh_bf16.size * 2
        + wheads.size * 4 + bheads.size * 4 + 2 * H * 4           # inputs
        + T_pad * HEAD_WIDTH * 4 + 2 * H * 4                      # outputs
        + T_pad * 4 * H * 4 + T_pad * H * 4                       # xg / y scratch
        + wheads.size * 4 + bheads.size * 4                       # head staging
    )
    vmem_limit = int(min(64 * 1024 * 1024, max(32 * 1024 * 1024, 2 * approx_vmem)))

    kernel = functools.partial(actor_critic_kernel,
                               t_real=T, t_pad=T_pad, hidden_size=H,
                               num_actions=A, input_size=INPUT_SIZE)
    vmem = pl.BlockSpec(memory_space=pltpu.MemorySpace.VMEM)
    anyspec = pl.BlockSpec(memory_space=pl.ANY)

    out, hn, cn = pl.pallas_call(
        kernel,
        out_shape=(
            jax.ShapeDtypeStruct((T_pad, HEAD_WIDTH), jnp.float32),
            jax.ShapeDtypeStruct((1, H), jnp.float32),
            jax.ShapeDtypeStruct((1, H), jnp.float32),
        ),
        in_specs=[vmem, vmem, vmem, vmem, anyspec, anyspec, vmem, vmem],
        out_specs=(vmem, vmem, vmem),
        scratch_shapes=[
            pltpu.VMEM((T_pad, 4 * H), jnp.float32),   # hoisted input projection
            pltpu.VMEM((T_pad, H), jnp.float32),       # post-relu hidden states
            pltpu.VMEM((H, HEAD_WIDTH), jnp.float32),  # head weights (DMA dst)
            pltpu.VMEM((1, HEAD_WIDTH), jnp.float32),  # head bias (DMA dst)
            pltpu.SemaphoreType.DMA((2,)),
        ],
        compiler_params=pltpu.CompilerParams(vmem_limit_bytes=vmem_limit),
    )(x2d, wih_t, b, whh_bf16, wheads, bheads, h0, c0)

    # Match PyTorch output shapes: (T, 1, A), (T, 1, 1), ((1, 1, H), (1, 1, H))
    pi = out[:T, :A].reshape(T, 1, A)
    v = out[:T, A:A + 1].reshape(T, 1, 1)
    return (pi, v, (hn.reshape(1, 1, H), cn.reshape(1, 1, H)))


def _reference_forward(x, params, hidden=None, *, whh_dtype=jnp.float32):
    """Pure-JAX reference of the PyTorch module.

    whh_dtype=jnp.bfloat16 mirrors the kernel's bf16 recurrent-weight path
    (f32 accumulation) for an exact-logic comparison.
    """
    H = HIDDEN_SIZE
    x2d = x.reshape(-1, INPUT_SIZE).astype(jnp.float32)
    T = x2d.shape[0]
    h = jnp.zeros((1, H), jnp.float32) if hidden is None else hidden[0].reshape(1, H)
    c = jnp.zeros((1, H), jnp.float32) if hidden is None else hidden[1].reshape(1, H)
    w_ih = params["w_ih"]
    w_hh = params["w_hh"].astype(whh_dtype)
    b = params["b_ih"] + params["b_hh"]
    ys = []
    for t in range(T):
        rec = jnp.dot(h.astype(whh_dtype), w_hh.T, preferred_element_type=jnp.float32)
        g = x2d[t:t + 1] @ w_ih.T + rec + b
        i = jax.nn.sigmoid(g[:, 0:H]); f = jax.nn.sigmoid(g[:, H:2 * H])
        gg = jnp.tanh(g[:, 2 * H:3 * H]); o = jax.nn.sigmoid(g[:, 3 * H:4 * H])
        c = f * c + i * gg
        h = o * jnp.tanh(c)
        ys.append(h)
    y = jnp.maximum(jnp.concatenate(ys, 0), 0.0)           # (T, H), relu
    logits = y @ params["w_pi"].T + params["b_pi"]
    pi = jax.nn.softmax(logits, axis=-1)
    v = y @ params["w_v"].T + params["b_v"]
    return (pi.reshape(T, 1, NUM_ACTIONS), v.reshape(T, 1, 1),
            (h.reshape(1, 1, H), c.reshape(1, 1, H)))


if __name__ == "__main__":
    key = jax.random.PRNGKey(0)
    k_param, k_x = jax.random.split(key)

    params = init_params(k_param)
    T = 8
    x = jax.random.normal(k_x, (T, 1, INPUT_SIZE), jnp.float32)

    pi, v, (hn, cn) = actor_critic_forward(x, params)
    jax.block_until_ready((pi, v, hn, cn))

    assert pi.shape == (T, 1, NUM_ACTIONS) and v.shape == (T, 1, 1)
    assert hn.shape == (1, 1, HIDDEN_SIZE) and cn.shape == (1, 1, HIDDEN_SIZE)
    assert jnp.allclose(jnp.sum(pi, axis=-1), 1.0, atol=1e-5), "pi not normalized"

    # Exact-logic check vs. a reference mirroring the kernel's bf16 whh path.
    pi_m, v_m, (hn_m, cn_m) = _reference_forward(x, params, whh_dtype=jnp.bfloat16)
    assert jnp.allclose(pi, pi_m, atol=1e-3), "pi mismatch (bf16 mirror)"
    assert jnp.allclose(v, v_m, atol=1e-3), "v mismatch (bf16 mirror)"
    assert jnp.allclose(hn, hn_m, atol=1e-3), "h_n mismatch (bf16 mirror)"
    assert jnp.allclose(cn, cn_m, atol=1e-3), "c_n mismatch (bf16 mirror)"

    # Precision-tradeoff check vs. the exact f32 PyTorch-equivalent reference
    # (bf16 recurrent weights cost ~1e-3 absolute error at T=8).
    pi_r, v_r, (hn_r, cn_r) = _reference_forward(x, params)
    assert jnp.allclose(pi, pi_r, atol=2e-2), "pi mismatch (f32 ref)"
    assert jnp.allclose(v, v_r, atol=2e-2), "v mismatch (f32 ref)"
    assert jnp.allclose(hn, hn_r, atol=2e-2), "h_n mismatch (f32 ref)"
    assert jnp.allclose(cn, cn_r, atol=2e-2), "c_n mismatch (f32 ref)"

    print("KERNEL_OK")
</pallas_src>

<mosaic_0001>
module attributes {stable_mosaic.version = 11 : i64} {
  func.func @actor_critic_kernel(%arg0: memref<8x2xf32, #tpu.memory_space<vmem>>, %arg1: memref<2x512xf32, #tpu.memory_space<vmem>>, %arg2: memref<1x512xf32, #tpu.memory_space<vmem>>, %arg3: memref<128x512xbf16, #tpu.memory_space<vmem>>, %arg4: memref<128x128xf32, #tpu.memory_space<any>>, %arg5: memref<1x128xf32, #tpu.memory_space<any>>, %arg6: memref<1x128xf32, #tpu.memory_space<vmem>>, %arg7: memref<1x128xf32, #tpu.memory_space<vmem>>, %arg8: memref<8x128xf32, #tpu.memory_space<vmem>>, %arg9: memref<1x128xf32, #tpu.memory_space<vmem>>, %arg10: memref<1x128xf32, #tpu.memory_space<vmem>>, %arg11: memref<8x512xf32, #tpu.memory_space<vmem>>, %arg12: memref<8x128xf32, #tpu.memory_space<vmem>>, %arg13: memref<128x128xf32, #tpu.memory_space<vmem>>, %arg14: memref<1x128xf32, #tpu.memory_space<vmem>>, %arg15: memref<2x!tpu.dma_semaphore, #tpu.memory_space<semaphore_mem>>) attributes {dimension_semantics = [], scalar_prefetch = 0 : i64, scratch_operands = 5 : i64, tpu.core_type = #tpu.core_type<tc>} {
    %c0_i32 = arith.constant 0 : i32
    %0 = tpu.memref_slice %arg15[%c0_i32] : memref<2x!tpu.dma_semaphore, #tpu.memory_space<semaphore_mem>> -> memref<1x!tpu.dma_semaphore, #tpu.memory_space<semaphore_mem>>
    %1 = tpu.memref_squeeze %0 : memref<1x!tpu.dma_semaphore, #tpu.memory_space<semaphore_mem>> -> memref<!tpu.dma_semaphore, #tpu.memory_space<semaphore_mem>>
    tpu.enqueue_dma source(%arg4 : memref<128x128xf32, #tpu.memory_space<any>>) target(%arg13 : memref<128x128xf32, #tpu.memory_space<vmem>>) target_semaphore(%1 : memref<!tpu.dma_semaphore, #tpu.memory_space<semaphore_mem>>)
    %c1_i32 = arith.constant 1 : i32
    %2 = tpu.memref_slice %arg15[%c1_i32] : memref<2x!tpu.dma_semaphore, #tpu.memory_space<semaphore_mem>> -> memref<1x!tpu.dma_semaphore, #tpu.memory_space<semaphore_mem>>
    %3 = tpu.memref_squeeze %2 : memref<1x!tpu.dma_semaphore, #tpu.memory_space<semaphore_mem>> -> memref<!tpu.dma_semaphore, #tpu.memory_space<semaphore_mem>>
    tpu.enqueue_dma source(%arg5 : memref<1x128xf32, #tpu.memory_space<any>>) target(%arg14 : memref<1x128xf32, #tpu.memory_space<vmem>>) target_semaphore(%3 : memref<!tpu.dma_semaphore, #tpu.memory_space<semaphore_mem>>)
    %c0 = arith.constant 0 : index
    %c0_0 = arith.constant 0 : index
    %4 = vector.load %arg2[%c0, %c0_0] : memref<1x512xf32, #tpu.memory_space<vmem>>, vector<1x512xf32>
    %5 = vector.shape_cast %4 : vector<1x512xf32> to vector<1x512xf32>
    %6 = vector.broadcast %5 : vector<1x512xf32> to vector<8x512xf32>
    %c0_1 = arith.constant 0 : index
    %c0_2 = arith.constant 0 : index
    %7 = vector.load %arg0[%c0_1, %c0_2] : memref<8x2xf32, #tpu.memory_space<vmem>>, vector<8x1xf32>
    %c0_3 = arith.constant 0 : index
    %c0_4 = arith.constant 0 : index
    %8 = vector.load %arg1[%c0_3, %c0_4] : memref<2x512xf32, #tpu.memory_space<vmem>>, vector<1x512xf32>
    %9 = vector.broadcast %7 : vector<8x1xf32> to vector<8x512xf32>
    %10 = vector.broadcast %8 : vector<1x512xf32> to vector<8x512xf32>
    %11 = arith.mulf %9, %10 : vector<8x512xf32>
    %12 = arith.addf %6, %11 : vector<8x512xf32>
    %c0_5 = arith.constant 0 : index
    %c1 = arith.constant 1 : index
    %13 = vector.load %arg0[%c0_5, %c1] : memref<8x2xf32, #tpu.memory_space<vmem>>, vector<8x1xf32>
    %c1_6 = arith.constant 1 : index
    %c0_7 = arith.constant 0 : index
    %14 = vector.load %arg1[%c1_6, %c0_7] : memref<2x512xf32, #tpu.memory_space<vmem>>, vector<1x512xf32>
    %15 = vector.broadcast %13 : vector<8x1xf32> to vector<8x512xf32>
    %16 = vector.broadcast %14 : vector<1x512xf32> to vector<8x512xf32>
    %17 = arith.mulf %15, %16 : vector<8x512xf32>
    %18 = arith.addf %12, %17 : vector<8x512xf32>
    %c0_8 = arith.constant 0 : index
    %c0_9 = arith.constant 0 : index
    %19 = vector.load %arg11[%c0_8, %c0_9] : memref<8x512xf32, #tpu.memory_space<vmem>>, vector<8x512xf32>
    tpu.vector_store %arg11[%c0_8, %c0_9], %18 {strides = array<i32>} : memref<8x512xf32, #tpu.memory_space<vmem>>, vector<8x512xf32>,
    %c0_10 = arith.constant 0 : index
    %c0_11 = arith.constant 0 : index
    %20 = vector.load %arg6[%c0_10, %c0_11] : memref<1x128xf32, #tpu.memory_space<vmem>>, vector<1x128xf32>
    %c0_12 = arith.constant 0 : index
    %c0_13 = arith.constant 0 : index
    %21 = vector.load %arg7[%c0_12, %c0_13] : memref<1x128xf32, #tpu.memory_space<vmem>>, vector<1x128xf32>
    %c0_i32_14 = arith.constant 0 : i32
    %c8_i32 = arith.constant 8 : i32
    %22 = arith.muli %c0_i32_14, %c8_i32 : i32
    %23 = tpu.assume_multiple %22, 8 : i32
    %c0_i32_15 = arith.constant 0 : i32
    %24 = arith.addi %23, %c0_i32_15 : i32
    %25 = arith.index_cast %24 : i32 to index
    %c0_16 = arith.constant 0 : index
    %26 = vector.load %arg11[%25, %c0_16] : memref<8x512xf32, #tpu.memory_space<vmem>>, vector<1x512xf32>
    %27 = arith.truncf %20 : vector<1x128xf32> to vector<1x128xbf16>
    %c0_17 = arith.constant 0 : index
    %c0_18 = arith.constant 0 : index
    %28 = vector.load %arg3[%c0_17, %c0_18] : memref<128x512xbf16, #tpu.memory_space<vmem>>, vector<128x512xbf16>
    %cst = arith.constant dense<0.000000e+00> : vector<1x512xf32>
    %29 = tpu.matmul %27, %28, %cst {dimension_numbers = #tpu.dot_dimension_numbers<[1], [0], [0], [1], [0, 0, 1, 1], [], []>} : vector<1x128xbf16>, vector<128x512xbf16>, vector<1x512xf32> -> vector<1x512xf32>
    %30 = arith.addf %26, %29 : vector<1x512xf32>
    %31 = vector.extract_strided_slice %30 {offsets = [0, 0], sizes = [1, 128], strides = [1, 1]} : vector<1x512xf32> to vector<1x128xf32>
    %32 = arith.negf %31 : vector<1x128xf32>
    %33 = math.exp %32 : vector<1x128xf32>
    %cst_19 = arith.constant 1.000000e+00 : f32
    %34 = vector.broadcast %cst_19 : f32 to vector<1x128xf32>
    %35 = arith.addf %34, %33 : vector<1x128xf32>
    %36 = arith.divf %34, %35 : vector<1x128xf32>
    %37 = vector.extract_strided_slice %30 {offsets = [0, 128], sizes = [1, 128], strides = [1, 1]} : vector<1x512xf32> to vector<1x128xf32>
    %38 = arith.negf %37 : vector<1x128xf32>
    %39 = math.exp %38 : vector<1x128xf32>
    %cst_20 = arith.constant 1.000000e+00 : f32
    %40 = vector.broadcast %cst_20 : f32 to vector<1x128xf32>
    %41 = arith.addf %40, %39 : vector<1x128xf32>
    %42 = arith.divf %40, %41 : vector<1x128xf32>
    %43 = vector.extract_strided_slice %30 {offsets = [0, 256], sizes = [1, 128], strides = [1, 1]} : vector<1x512xf32> to vector<1x128xf32>
    %44 = math.tanh %43 : vector<1x128xf32>
    %45 = vector.extract_strided_slice %30 {offsets = [0, 384], sizes = [1, 128], strides = [1, 1]} : vector<1x512xf32> to vector<1x128xf32>
    %46 = arith.negf %45 : vector<1x128xf32>
    %47 = math.exp %46 : vector<1x128xf32>
    %cst_21 = arith.constant 1.000000e+00 : f32
    %48 = vector.broadcast %cst_21 : f32 to vector<1x128xf32>
    %49 = arith.addf %48, %47 : vector<1x128xf32>
    %50 = arith.divf %48, %49 : vector<1x128xf32>
    %51 = arith.mulf %42, %21 : vector<1x128xf32>
    %52 = arith.mulf %36, %44 : vector<1x128xf32>
    %53 = arith.addf %51, %52 : vector<1x128xf32>
    %54 = math.tanh %53 : vector<1x128xf32>
    %55 = arith.mulf %50, %54 : vector<1x128xf32>
    %cst_22 = arith.constant 0.000000e+00 : f32
    %56 = vector.broadcast %cst_22 : f32 to vector<1x128xf32>
    %57 = arith.maximumf %55, %56 : vector<1x128xf32>
    %c1_i32_23 = arith.constant 1 : i32
    %58 = arith.addi %23, %c1_i32_23 : i32
    %59 = arith.index_cast %58 : i32 to index
    %c0_24 = arith.constant 0 : index
    %60 = vector.load %arg11[%59, %c0_24] : memref<8x512xf32, #tpu.memory_space<vmem>>, vector<1x512xf32>
    %61 = arith.truncf %55 : vector<1x128xf32> to vector<1x128xbf16>
    %c0_25 = arith.constant 0 : index
    %c0_26 = arith.constant 0 : index
    %62 = vector.load %arg3[%c0_25, %c0_26] : memref<128x512xbf16, #tpu.memory_space<vmem>>, vector<128x512xbf16>
    %cst_27 = arith.constant dense<0.000000e+00> : vector<1x512xf32>
    %63 = tpu.matmul %61, %62, %cst_27 {dimension_numbers = #tpu.dot_dimension_numbers<[1], [0], [0], [1], [0, 0, 1, 1], [], []>} : vector<1x128xbf16>, vector<128x512xbf16>, vector<1x512xf32> -> vector<1x512xf32>
    %64 = arith.addf %60, %63 : vector<1x512xf32>
    %65 = vector.extract_strided_slice %64 {offsets = [0, 0], sizes = [1, 128], strides = [1, 1]} : vector<1x512xf32> to vector<1x128xf32>
    %66 = arith.negf %65 : vector<1x128xf32>
    %67 = math.exp %66 : vector<1x128xf32>
    %cst_28 = arith.constant 1.000000e+00 : f32
    %68 = vector.broadcast %cst_28 : f32 to vector<1x128xf32>
    %69 = arith.addf %68, %67 : vector<1x128xf32>
    %70 = arith.divf %68, %69 : vector<1x128xf32>
    %71 = vector.extract_strided_slice %64 {offsets = [0, 128], sizes = [1, 128], strides = [1, 1]} : vector<1x512xf32> to vector<1x128xf32>
    %72 = arith.negf %71 : vector<1x128xf32>
    %73 = math.exp %72 : vector<1x128xf32>
    %cst_29 = arith.constant 1.000000e+00 : f32
    %74 = vector.broadcast %cst_29 : f32 to vector<1x128xf32>
    %75 = arith.addf %74, %73 : vector<1x128xf32>
    %76 = arith.divf %74, %75 : vector<1x128xf32>
    %77 = vector.extract_strided_slice %64 {offsets = [0, 256], sizes = [1, 128], strides = [1, 1]} : vector<1x512xf32> to vector<1x128xf32>
    %78 = math.tanh %77 : vector<1x128xf32>
    %79 = vector.extract_strided_slice %64 {offsets = [0, 384], sizes = [1, 128], strides = [1, 1]} : vector<1x512xf32> to vector<1x128xf32>
    %80 = arith.negf %79 : vector<1x128xf32>
    %81 = math.exp %80 : vector<1x128xf32>
    %cst_30 = arith.constant 1.000000e+00 : f32
    %82 = vector.broadcast %cst_30 : f32 to vector<1x128xf32>
    %83 = arith.addf %82, %81 : vector<1x128xf32>
    %84 = arith.divf %82, %83 : vector<1x128xf32>
    %85 = arith.mulf %76, %53 : vector<1x128xf32>
    %86 = arith.mulf %70, %78 : vector<1x128xf32>
    %87 = arith.addf %85, %86 : vector<1x128xf32>
    %88 = math.tanh %87 : vector<1x128xf32>
    %89 = arith.mulf %84, %88 : vector<1x128xf32>
    %cst_31 = arith.constant 0.000000e+00 : f32
    %90 = vector.broadcast %cst_31 : f32 to vector<1x128xf32>
    %91 = arith.maximumf %89, %90 : vector<1x128xf32>
    %c2_i32 = arith.constant 2 : i32
    %92 = arith.addi %23, %c2_i32 : i32
    %93 = arith.index_cast %92 : i32 to index
    %c0_32 = arith.constant 0 : index
    %94 = vector.load %arg11[%93, %c0_32] : memref<8x512xf32, #tpu.memory_space<vmem>>, vector<1x512xf32>
    %95 = arith.truncf %89 : vector<1x128xf32> to vector<1x128xbf16>
    %c0_33 = arith.constant 0 : index
    %c0_34 = arith.constant 0 : index
    %96 = vector.load %arg3[%c0_33, %c0_34] : memref<128x512xbf16, #tpu.memory_space<vmem>>, vector<128x512xbf16>
    %cst_35 = arith.constant dense<0.000000e+00> : vector<1x512xf32>
    %97 = tpu.matmul %95, %96, %cst_35 {dimension_numbers = #tpu.dot_dimension_numbers<[1], [0], [0], [1], [0, 0, 1, 1], [], []>} : vector<1x128xbf16>, vector<128x512xbf16>, vector<1x512xf32> -> vector<1x512xf32>
    %98 = arith.addf %94, %97 : vector<1x512xf32>
    %99 = vector.extract_strided_slice %98 {offsets = [0, 0], sizes = [1, 128], strides = [1, 1]} : vector<1x512xf32> to vector<1x128xf32>
    %100 = arith.negf %99 : vector<1x128xf32>
    %101 = math.exp %100 : vector<1x128xf32>
    %cst_36 = arith.constant 1.000000e+00 : f32
    %102 = vector.broadcast %cst_36 : f32 to vector<1x128xf32>
    %103 = arith.addf %102, %101 : vector<1x128xf32>
    %104 = arith.divf %102, %103 : vector<1x128xf32>
    %105 = vector.extract_strided_slice %98 {offsets = [0, 128], sizes = [1, 128], strides = [1, 1]} : vector<1x512xf32> to vector<1x128xf32>
    %106 = arith.negf %105 : vector<1x128xf32>
    %107 = math.exp %106 : vector<1x128xf32>
    %cst_37 = arith.constant 1.000000e+00 : f32
    %108 = vector.broadcast %cst_37 : f32 to vector<1x128xf32>
    %109 = arith.addf %108, %107 : vector<1x128xf32>
    %110 = arith.divf %108, %109 : vector<1x128xf32>
    %111 = vector.extract_strided_slice %98 {offsets = [0, 256], sizes = [1, 128], strides = [1, 1]} : vector<1x512xf32> to vector<1x128xf32>
    %112 = math.tanh %111 : vector<1x128xf32>
    %113 = vector.extract_strided_slice %98 {offsets = [0, 384], sizes = [1, 128], strides = [1, 1]} : vector<1x512xf32> to vector<1x128xf32>
    %114 = arith.negf %113 : vector<1x128xf32>
    %115 = math.exp %114 : vector<1x128xf32>
    %cst_38 = arith.constant 1.000000e+00 : f32
    %116 = vector.broadcast %cst_38 : f32 to vector<1x128xf32>
    %117 = arith.addf %116, %115 : vector<1x128xf32>
    %118 = arith.divf %116, %117 : vector<1x128xf32>
    %119 = arith.mulf %110, %87 : vector<1x128xf32>
    %120 = arith.mulf %104, %112 : vector<1x128xf32>
    %121 = arith.addf %119, %120 : vector<1x128xf32>
    %122 = math.tanh %121 : vector<1x128xf32>
    %123 = arith.mulf %118, %122 : vector<1x128xf32>
    %cst_39 = arith.constant 0.000000e+00 : f32
    %124 = vector.broadcast %cst_39 : f32 to vector<1x128xf32>
    %125 = arith.maximumf %123, %124 : vector<1x128xf32>
    %c3_i32 = arith.constant 3 : i32
    %126 = arith.addi %23, %c3_i32 : i32
    %127 = arith.index_cast %126 : i32 to index
    %c0_40 = arith.constant 0 : index
    %128 = vector.load %arg11[%127, %c0_40] : memref<8x512xf32, #tpu.memory_space<vmem>>, vector<1x512xf32>
    %129 = arith.truncf %123 : vector<1x128xf32> to vector<1x128xbf16>
    %c0_41 = arith.constant 0 : index
    %c0_42 = arith.constant 0 : index
    %130 = vector.load %arg3[%c0_41, %c0_42] : memref<128x512xbf16, #tpu.memory_space<vmem>>, vector<128x512xbf16>
    %cst_43 = arith.constant dense<0.000000e+00> : vector<1x512xf32>
    %131 = tpu.matmul %129, %130, %cst_43 {dimension_numbers = #tpu.dot_dimension_numbers<[1], [0], [0], [1], [0, 0, 1, 1], [], []>} : vector<1x128xbf16>, vector<128x512xbf16>, vector<1x512xf32> -> vector<1x512xf32>
    %132 = arith.addf %128, %131 : vector<1x512xf32>
    %133 = vector.extract_strided_slice %132 {offsets = [0, 0], sizes = [1, 128], strides = [1, 1]} : vector<1x512xf32> to vector<1x128xf32>
    %134 = arith.negf %133 : vector<1x128xf32>
    %135 = math.exp %134 : vector<1x128xf32>
    %cst_44 = arith.constant 1.000000e+00 : f32
    %136 = vector.broadcast %cst_44 : f32 to vector<1x128xf32>
    %137 = arith.addf %136, %135 : vector<1x128xf32>
    %138 = arith.divf %136, %137 : vector<1x128xf32>
    %139 = vector.extract_strided_slice %132 {offsets = [0, 128], sizes = [1, 128], strides = [1, 1]} : vector<1x512xf32> to vector<1x128xf32>
    %140 = arith.negf %139 : vector<1x128xf32>
    %141 = math.exp %140 : vector<1x128xf32>
    %cst_45 = arith.constant 1.000000e+00 : f32
    %142 = vector.broadcast %cst_45 : f32 to vector<1x128xf32>
    %143 = arith.addf %142, %141 : vector<1x128xf32>
    %144 = arith.divf %142, %143 : vector<1x128xf32>
    %145 = vector.extract_strided_slice %132 {offsets = [0, 256], sizes = [1, 128], strides = [1, 1]} : vector<1x512xf32> to vector<1x128xf32>
    %146 = math.tanh %145 : vector<1x128xf32>
    %147 = vector.extract_strided_slice %132 {offsets = [0, 384], sizes = [1, 128], strides = [1, 1]} : vector<1x512xf32> to vector<1x128xf32>
    %148 = arith.negf %147 : vector<1x128xf32>
    %149 = math.exp %148 : vector<1x128xf32>
    %cst_46 = arith.constant 1.000000e+00 : f32
    %150 = vector.broadcast %cst_46 : f32 to vector<1x128xf32>
    %151 = arith.addf %150, %149 : vector<1x128xf32>
    %152 = arith.divf %150, %151 : vector<1x128xf32>
    %153 = arith.mulf %144, %121 : vector<1x128xf32>
    %154 = arith.mulf %138, %146 : vector<1x128xf32>
    %155 = arith.addf %153, %154 : vector<1x128xf32>
    %156 = math.tanh %155 : vector<1x128xf32>
    %157 = arith.mulf %152, %156 : vector<1x128xf32>
    %cst_47 = arith.constant 0.000000e+00 : f32
    %158 = vector.broadcast %cst_47 : f32 to vector<1x128xf32>
    %159 = arith.maximumf %157, %158 : vector<1x128xf32>
    %c4_i32 = arith.constant 4 : i32
    %160 = arith.addi %23, %c4_i32 : i32
    %161 = arith.index_cast %160 : i32 to index
    %c0_48 = arith.constant 0 : index
    %162 = vector.load %arg11[%161, %c0_48] : memref<8x512xf32, #tpu.memory_space<vmem>>, vector<1x512xf32>
    %163 = arith.truncf %157 : vector<1x128xf32> to vector<1x128xbf16>
    %c0_49 = arith.constant 0 : index
    %c0_50 = arith.constant 0 : index
    %164 = vector.load %arg3[%c0_49, %c0_50] : memref<128x512xbf16, #tpu.memory_space<vmem>>, vector<128x512xbf16>
    %cst_51 = arith.constant dense<0.000000e+00> : vector<1x512xf32>
    %165 = tpu.matmul %163, %164, %cst_51 {dimension_numbers = #tpu.dot_dimension_numbers<[1], [0], [0], [1], [0, 0, 1, 1], [], []>} : vector<1x128xbf16>, vector<128x512xbf16>, vector<1x512xf32> -> vector<1x512xf32>
    %166 = arith.addf %162, %165 : vector<1x512xf32>
    %167 = vector.extract_strided_slice %166 {offsets = [0, 0], sizes = [1, 128], strides = [1, 1]} : vector<1x512xf32> to vector<1x128xf32>
    %168 = arith.negf %167 : vector<1x128xf32>
    %169 = math.exp %168 : vector<1x128xf32>
    %cst_52 = arith.constant 1.000000e+00 : f32
    %170 = vector.broadcast %cst_52 : f32 to vector<1x128xf32>
    %171 = arith.addf %170, %169 : vector<1x128xf32>
    %172 = arith.divf %170, %171 : vector<1x128xf32>
    %173 = vector.extract_strided_slice %166 {offsets = [0, 128], sizes = [1, 128], strides = [1, 1]} : vector<1x512xf32> to vector<1x128xf32>
    %174 = arith.negf %173 : vector<1x128xf32>
    %175 = math.exp %174 : vector<1x128xf32>
    %cst_53 = arith.constant 1.000000e+00 : f32
    %176 = vector.broadcast %cst_53 : f32 to vector<1x128xf32>
    %177 = arith.addf %176, %175 : vector<1x128xf32>
    %178 = arith.divf %176, %177 : vector<1x128xf32>
    %179 = vector.extract_strided_slice %166 {offsets = [0, 256], sizes = [1, 128], strides = [1, 1]} : vector<1x512xf32> to vector<1x128xf32>
    %180 = math.tanh %179 : vector<1x128xf32>
    %181 = vector.extract_strided_slice %166 {offsets = [0, 384], sizes = [1, 128], strides = [1, 1]} : vector<1x512xf32> to vector<1x128xf32>
    %182 = arith.negf %181 : vector<1x128xf32>
    %183 = math.exp %182 : vector<1x128xf32>
    %cst_54 = arith.constant 1.000000e+00 : f32
    %184 = vector.broadcast %cst_54 : f32 to vector<1x128xf32>
    %185 = arith.addf %184, %183 : vector<1x128xf32>
    %186 = arith.divf %184, %185 : vector<1x128xf32>
    %187 = arith.mulf %178, %155 : vector<1x128xf32>
    %188 = arith.mulf %172, %180 : vector<1x128xf32>
    %189 = arith.addf %187, %188 : vector<1x128xf32>
    %190 = math.tanh %189 : vector<1x128xf32>
    %191 = arith.mulf %186, %190 : vector<1x128xf32>
    %cst_55 = arith.constant 0.000000e+00 : f32
    %192 = vector.broadcast %cst_55 : f32 to vector<1x128xf32>
    %193 = arith.maximumf %191, %192 : vector<1x128xf32>
    %c5_i32 = arith.constant 5 : i32
    %194 = arith.addi %23, %c5_i32 : i32
    %195 = arith.index_cast %194 : i32 to index
    %c0_56 = arith.constant 0 : index
    %196 = vector.load %arg11[%195, %c0_56] : memref<8x512xf32, #tpu.memory_space<vmem>>, vector<1x512xf32>
    %197 = arith.truncf %191 : vector<1x128xf32> to vector<1x128xbf16>
    %c0_57 = arith.constant 0 : index
    %c0_58 = arith.constant 0 : index
    %198 = vector.load %arg3[%c0_57, %c0_58] : memref<128x512xbf16, #tpu.memory_space<vmem>>, vector<128x512xbf16>
    %cst_59 = arith.constant dense<0.000000e+00> : vector<1x512xf32>
    %199 = tpu.matmul %197, %198, %cst_59 {dimension_numbers = #tpu.dot_dimension_numbers<[1], [0], [0], [1], [0, 0, 1, 1], [], []>} : vector<1x128xbf16>, vector<128x512xbf16>, vector<1x512xf32> -> vector<1x512xf32>
    %200 = arith.addf %196, %199 : vector<1x512xf32>
    %201 = vector.extract_strided_slice %200 {offsets = [0, 0], sizes = [1, 128], strides = [1, 1]} : vector<1x512xf32> to vector<1x128xf32>
    %202 = arith.negf %201 : vector<1x128xf32>
    %203 = math.exp %202 : vector<1x128xf32>
    %cst_60 = arith.constant 1.000000e+00 : f32
    %204 = vector.broadcast %cst_60 : f32 to vector<1x128xf32>
    %205 = arith.addf %204, %203 : vector<1x128xf32>
    %206 = arith.divf %204, %205 : vector<1x128xf32>
    %207 = vector.extract_strided_slice %200 {offsets = [0, 128], sizes = [1, 128], strides = [1, 1]} : vector<1x512xf32> to vector<1x128xf32>
    %208 = arith.negf %207 : vector<1x128xf32>
    %209 = math.exp %208 : vector<1x128xf32>
    %cst_61 = arith.constant 1.000000e+00 : f32
    %210 = vector.broadcast %cst_61 : f32 to vector<1x128xf32>
    %211 = arith.addf %210, %209 : vector<1x128xf32>
    %212 = arith.divf %210, %211 : vector<1x128xf32>
    %213 = vector.extract_strided_slice %200 {offsets = [0, 256], sizes = [1, 128], strides = [1, 1]} : vector<1x512xf32> to vector<1x128xf32>
    %214 = math.tanh %213 : vector<1x128xf32>
    %215 = vector.extract_strided_slice %200 {offsets = [0, 384], sizes = [1, 128], strides = [1, 1]} : vector<1x512xf32> to vector<1x128xf32>
    %216 = arith.negf %215 : vector<1x128xf32>
    %217 = math.exp %216 : vector<1x128xf32>
    %cst_62 = arith.constant 1.000000e+00 : f32
    %218 = vector.broadcast %cst_62 : f32 to vector<1x128xf32>
    %219 = arith.addf %218, %217 : vector<1x128xf32>
    %220 = arith.divf %218, %219 : vector<1x128xf32>
    %221 = arith.mulf %212, %189 : vector<1x128xf32>
    %222 = arith.mulf %206, %214 : vector<1x128xf32>
    %223 = arith.addf %221, %222 : vector<1x128xf32>
    %224 = math.tanh %223 : vector<1x128xf32>
    %225 = arith.mulf %220, %224 : vector<1x128xf32>
    %cst_63 = arith.constant 0.000000e+00 : f32
    %226 = vector.broadcast %cst_63 : f32 to vector<1x128xf32>
    %227 = arith.maximumf %225, %226 : vector<1x128xf32>
    %c6_i32 = arith.constant 6 : i32
    %228 = arith.addi %23, %c6_i32 : i32
    %229 = arith.index_cast %228 : i32 to index
    %c0_64 = arith.constant 0 : index
    %230 = vector.load %arg11[%229, %c0_64] : memref<8x512xf32, #tpu.memory_space<vmem>>, vector<1x512xf32>
    %231 = arith.truncf %225 : vector<1x128xf32> to vector<1x128xbf16>
    %c0_65 = arith.constant 0 : index
    %c0_66 = arith.constant 0 : index
    %232 = vector.load %arg3[%c0_65, %c0_66] : memref<128x512xbf16, #tpu.memory_space<vmem>>, vector<128x512xbf16>
    %cst_67 = arith.constant dense<0.000000e+00> : vector<1x512xf32>
    %233 = tpu.matmul %231, %232, %cst_67 {dimension_numbers = #tpu.dot_dimension_numbers<[1], [0], [0], [1], [0, 0, 1, 1], [], []>} : vector<1x128xbf16>, vector<128x512xbf16>, vector<1x512xf32> -> vector<1x512xf32>
    %234 = arith.addf %230, %233 : vector<1x512xf32>
    %235 = vector.extract_strided_slice %234 {offsets = [0, 0], sizes = [1, 128], strides = [1, 1]} : vector<1x512xf32> to vector<1x128xf32>
    %236 = arith.negf %235 : vector<1x128xf32>
    %237 = math.exp %236 : vector<1x128xf32>
    %cst_68 = arith.constant 1.000000e+00 : f32
    %238 = vector.broadcast %cst_68 : f32 to vector<1x128xf32>
    %239 = arith.addf %238, %237 : vector<1x128xf32>
    %240 = arith.divf %238, %239 : vector<1x128xf32>
    %241 = vector.extract_strided_slice %234 {offsets = [0, 128], sizes = [1, 128], strides = [1, 1]} : vector<1x512xf32> to vector<1x128xf32>
    %242 = arith.negf %241 : vector<1x128xf32>
    %243 = math.exp %242 : vector<1x128xf32>
    %cst_69 = arith.constant 1.000000e+00 : f32
    %244 = vector.broadcast %cst_69 : f32 to vector<1x128xf32>
    %245 = arith.addf %244, %243 : vector<1x128xf32>
    %246 = arith.divf %244, %245 : vector<1x128xf32>
    %247 = vector.extract_strided_slice %234 {offsets = [0, 256], sizes = [1, 128], strides = [1, 1]} : vector<1x512xf32> to vector<1x128xf32>
    %248 = math.tanh %247 : vector<1x128xf32>
    %249 = vector.extract_strided_slice %234 {offsets = [0, 384], sizes = [1, 128], strides = [1, 1]} : vector<1x512xf32> to vector<1x128xf32>
    %250 = arith.negf %249 : vector<1x128xf32>
    %251 = math.exp %250 : vector<1x128xf32>
    %cst_70 = arith.constant 1.000000e+00 : f32
    %252 = vector.broadcast %cst_70 : f32 to vector<1x128xf32>
    %253 = arith.addf %252, %251 : vector<1x128xf32>
    %254 = arith.divf %252, %253 : vector<1x128xf32>
    %255 = arith.mulf %246, %223 : vector<1x128xf32>
    %256 = arith.mulf %240, %248 : vector<1x128xf32>
    %257 = arith.addf %255, %256 : vector<1x128xf32>
    %258 = math.tanh %257 : vector<1x128xf32>
    %259 = arith.mulf %254, %258 : vector<1x128xf32>
    %cst_71 = arith.constant 0.000000e+00 : f32
    %260 = vector.broadcast %cst_71 : f32 to vector<1x128xf32>
    %261 = arith.maximumf %259, %260 : vector<1x128xf32>
    %c7_i32 = arith.constant 7 : i32
    %262 = arith.addi %23, %c7_i32 : i32
    %263 = arith.index_cast %262 : i32 to index
    %c0_72 = arith.constant 0 : index
    %264 = vector.load %arg11[%263, %c0_72] : memref<8x512xf32, #tpu.memory_space<vmem>>, vector<1x512xf32>
    %265 = arith.truncf %259 : vector<1x128xf32> to vector<1x128xbf16>
    %c0_73 = arith.constant 0 : index
    %c0_74 = arith.constant 0 : index
    %266 = vector.load %arg3[%c0_73, %c0_74] : memref<128x512xbf16, #tpu.memory_space<vmem>>, vector<128x512xbf16>
    %cst_75 = arith.constant dense<0.000000e+00> : vector<1x512xf32>
    %267 = tpu.matmul %265, %266, %cst_75 {dimension_numbers = #tpu.dot_dimension_numbers<[1], [0], [0], [1], [0, 0, 1, 1], [], []>} : vector<1x128xbf16>, vector<128x512xbf16>, vector<1x512xf32> -> vector<1x512xf32>
    %268 = arith.addf %264, %267 : vector<1x512xf32>
    %269 = vector.extract_strided_slice %268 {offsets = [0, 0], sizes = [1, 128], strides = [1, 1]} : vector<1x512xf32> to vector<1x128xf32>
    %270 = arith.negf %269 : vector<1x128xf32>
    %271 = math.exp %270 : vector<1x128xf32>
    %cst_76 = arith.constant 1.000000e+00 : f32
    %272 = vector.broadcast %cst_76 : f32 to vector<1x128xf32>
    %273 = arith.addf %272, %271 : vector<1x128xf32>
    %274 = arith.divf %272, %273 : vector<1x128xf32>
    %275 = vector.extract_strided_slice %268 {offsets = [0, 128], sizes = [1, 128], strides = [1, 1]} : vector<1x512xf32> to vector<1x128xf32>
    %276 = arith.negf %275 : vector<1x128xf32>
    %277 = math.exp %276 : vector<1x128xf32>
    %cst_77 = arith.constant 1.000000e+00 : f32
    %278 = vector.broadcast %cst_77 : f32 to vector<1x128xf32>
    %279 = arith.addf %278, %277 : vector<1x128xf32>
    %280 = arith.divf %278, %279 : vector<1x128xf32>
    %281 = vector.extract_strided_slice %268 {offsets = [0, 256], sizes = [1, 128], strides = [1, 1]} : vector<1x512xf32> to vector<1x128xf32>
    %282 = math.tanh %281 : vector<1x128xf32>
    %283 = vector.extract_strided_slice %268 {offsets = [0, 384], sizes = [1, 128], strides = [1, 1]} : vector<1x512xf32> to vector<1x128xf32>
    %284 = arith.negf %283 : vector<1x128xf32>
    %285 = math.exp %284 : vector<1x128xf32>
    %cst_78 = arith.constant 1.000000e+00 : f32
    %286 = vector.broadcast %cst_78 : f32 to vector<1x128xf32>
    %287 = arith.addf %286, %285 : vector<1x128xf32>
    %288 = arith.divf %286, %287 : vector<1x128xf32>
    %289 = arith.mulf %280, %257 : vector<1x128xf32>
    %290 = arith.mulf %274, %282 : vector<1x128xf32>
    %291 = arith.addf %289, %290 : vector<1x128xf32>
    %292 = math.tanh %291 : vector<1x128xf32>
    %293 = arith.mulf %288, %292 : vector<1x128xf32>
    %cst_79 = arith.constant 0.000000e+00 : f32
    %294 = vector.broadcast %cst_79 : f32 to vector<1x128xf32>
    %295 = arith.maximumf %293, %294 : vector<1x128xf32>
    %296 = tpu.concatenate %57, %91, %125, %159, %193, %227, %261, %295 in 0 : vector<1x128xf32>, vector<1x128xf32>, vector<1x128xf32>, vector<1x128xf32>, vector<1x128xf32>, vector<1x128xf32>, vector<1x128xf32>, vector<1x128xf32> -> vector<8x128xf32>
    %297 = arith.index_cast %23 : i32 to index
    %c0_80 = arith.constant 0 : index
    %298 = vector.load %arg12[%297, %c0_80] : memref<8x128xf32, #tpu.memory_space<vmem>>, vector<8x128xf32>
    tpu.vector_store %arg12[%297, %c0_80], %296 {strides = array<i32>} : memref<8x128xf32, #tpu.memory_space<vmem>>, vector<8x128xf32>,
    %c1_i32_81 = arith.constant 1 : i32
    %c0_82 = arith.constant 0 : index
    %c0_83 = arith.constant 0 : index
    %299 = vector.load %arg9[%c0_82, %c0_83] : memref<1x128xf32, #tpu.memory_space<vmem>>, vector<1x128xf32>
    tpu.vector_store %arg9[%c0_82, %c0_83], %293 {strides = array<i32>} : memref<1x128xf32, #tpu.memory_space<vmem>>, vector<1x128xf32>,
    %c0_84 = arith.constant 0 : index
    %c0_85 = arith.constant 0 : index
    %300 = vector.load %arg10[%c0_84, %c0_85] : memref<1x128xf32, #tpu.memory_space<vmem>>, vector<1x128xf32>
    tpu.vector_store %arg10[%c0_84, %c0_85], %291 {strides = array<i32>} : memref<1x128xf32, #tpu.memory_space<vmem>>, vector<1x128xf32>,
    %c0_i32_86 = arith.constant 0 : i32
    %301 = tpu.memref_slice %arg15[%c0_i32_86] : memref<2x!tpu.dma_semaphore, #tpu.memory_space<semaphore_mem>> -> memref<1x!tpu.dma_semaphore, #tpu.memory_space<semaphore_mem>>
    %302 = tpu.memref_squeeze %301 : memref<1x!tpu.dma_semaphore, #tpu.memory_space<semaphore_mem>> -> memref<!tpu.dma_semaphore, #tpu.memory_space<semaphore_mem>>
    tpu.wait_dma2 semaphore(%302 : memref<!tpu.dma_semaphore, #tpu.memory_space<semaphore_mem>>) src(%arg4 : memref<128x128xf32, #tpu.memory_space<any>>) dst(%arg13 : memref<128x128xf32, #tpu.memory_space<vmem>>)
    %c1_i32_87 = arith.constant 1 : i32
    %303 = tpu.memref_slice %arg15[%c1_i32_87] : memref<2x!tpu.dma_semaphore, #tpu.memory_space<semaphore_mem>> -> memref<1x!tpu.dma_semaphore, #tpu.memory_space<semaphore_mem>>
    %304 = tpu.memref_squeeze %303 : memref<1x!tpu.dma_semaphore, #tpu.memory_space<semaphore_mem>> -> memref<!tpu.dma_semaphore, #tpu.memory_space<semaphore_mem>>
    tpu.wait_dma2 semaphore(%304 : memref<!tpu.dma_semaphore, #tpu.memory_space<semaphore_mem>>) src(%arg5 : memref<1x128xf32, #tpu.memory_space<any>>) dst(%arg14 : memref<1x128xf32, #tpu.memory_space<vmem>>)
    %c0_88 = arith.constant 0 : index
    %c0_89 = arith.constant 0 : index
    %305 = vector.load %arg12[%c0_88, %c0_89] : memref<8x128xf32, #tpu.memory_space<vmem>>, vector<8x128xf32>
    %c0_90 = arith.constant 0 : index
    %c0_91 = arith.constant 0 : index
    %306 = vector.load %arg13[%c0_90, %c0_91] : memref<128x128xf32, #tpu.memory_space<vmem>>, vector<128x128xf32>
    %cst_92 = arith.constant dense<0.000000e+00> : vector<8x128xf32>
    %307 = tpu.matmul %305, %306, %cst_92 {dimension_numbers = #tpu.dot_dimension_numbers<[1], [0], [0], [1], [0, 0, 1, 1], [], []>} : vector<8x128xf32>, vector<128x128xf32>, vector<8x128xf32> -> vector<8x128xf32>
    %c0_93 = arith.constant 0 : index
    %c0_94 = arith.constant 0 : index
    %308 = vector.load %arg14[%c0_93, %c0_94] : memref<1x128xf32, #tpu.memory_space<vmem>>, vector<1x128xf32>
    %309 = vector.broadcast %308 : vector<1x128xf32> to vector<8x128xf32>
    %310 = arith.addf %307, %309 : vector<8x128xf32>
    %311 = tpu.iota {dimensions = array<i32: 1>} : vector<8x128xi32>
    %c2_i32_95 = arith.constant 2 : i32
    %312 = vector.broadcast %c2_i32_95 : i32 to vector<8x128xi32>
    %313 = arith.cmpi slt, %311, %312 : vector<8x128xi32>
    %cst_96 = arith.constant -1.000000e+30 : f32
    %314 = vector.broadcast %cst_96 : f32 to vector<8x128xf32>
    %315 = arith.select %313, %310, %314 : vector<8x128xi1>, vector<8x128xf32>
    %cst_97 = arith.constant dense<0xFF800000> : vector<8xf32>
    %316 = vector.multi_reduction <maximumf>, %315, %cst_97 [1] : vector<8x128xf32> to vector<8xf32>
    %317 = vector.shape_cast %316 : vector<8xf32> to vector<8x1xf32>
    %318 = vector.broadcast %317 : vector<8x1xf32> to vector<8x128xf32>
    %319 = arith.subf %315, %318 : vector<8x128xf32>
    %320 = math.exp %319 : vector<8x128xf32>
    %cst_98 = arith.constant 0.000000e+00 : f32
    %321 = vector.broadcast %cst_98 : f32 to vector<8x128xf32>
    %322 = arith.select %313, %320, %321 : vector<8x128xi1>, vector<8x128xf32>
    %cst_99 = arith.constant dense<0.000000e+00> : vector<8xf32>
    %323 = vector.multi_reduction <add>, %322, %cst_99 [1] : vector<8x128xf32> to vector<8xf32>
    %324 = vector.shape_cast %323 : vector<8xf32> to vector<8x1xf32>
    %325 = vector.broadcast %324 : vector<8x1xf32> to vector<8x128xf32>
    %326 = arith.divf %322, %325 : vector<8x128xf32>
    %327 = arith.select %313, %326, %310 : vector<8x128xi1>, vector<8x128xf32>
    %c0_100 = arith.constant 0 : index
    %c0_101 = arith.constant 0 : index
    %328 = vector.load %arg8[%c0_100, %c0_101] : memref<8x128xf32, #tpu.memory_space<vmem>>, vector<8x128xf32>
    tpu.vector_store %arg8[%c0_100, %c0_101], %327 {strides = array<i32>} : memref<8x128xf32, #tpu.memory_space<vmem>>, vector<8x128xf32>,
    return
  }
}

</mosaic_0001>

<llo_original>
// kernel: actor_critic_forward.1
$region0: #{actor_critic_forward.1}
  #allocation0 [shape = 'u32[]', space=smem, size = 0x4, offset = 0x4, fixed_abs, tag = 'smem constant byte address 0x4 - core index']
  #allocation1 [shape = 'u32[72,128]{1,0:T(1,128)}', space=vmem, size = 0x9000, scoped, tag = 'internal scratch']
  #allocation2 [shape = 'f32[8,512]{1,0:T(8,128)}', space=vmem, size = 0x4000, scoped, tag = 'scratch operand']
  #allocation3 [shape = 'f32[8,128]{1,0:T(8,128)}', space=vmem, size = 0x1000, scoped, tag = 'scratch operand']
  #allocation4 [shape = 'f32[128,128]{1,0:T(8,128)}', space=vmem, size = 0x10000, scoped, tag = 'scratch operand']
  #allocation5 [shape = 'f32[1,128]{1,0:T(1,128)}', space=vmem, size = 0x200, scoped, tag = 'scratch operand']
  #allocation6 [shape = 's32[2]{0}', space=sflag, size = 0x8, scoped, tag = 'scratch operand']
  #allocation11 [shape = 's32[]', space=sflag, size = 0x4, offset = 0, fixed_abs, tag = 'sflag constant byte address 0x0 - dummy sync flag']
  #allocation12 [shape = 's32[]', space=sflag, size = 0x4, offset = 0, fixed_abs, tag = 'sflag constant byte address 0x0 - dummy sync flag']
  %s0 = inlined_call_operand.vmem [shape: f32[8,2], index: 0, kind: input, shape index: {}]
  %s1 = inlined_call_operand.vmem [shape: f32[2,512], index: 1, kind: input, shape index: {}]
  %s2 = inlined_call_operand.vmem [shape: f32[1,512], index: 2, kind: input, shape index: {}]
  %s3 = inlined_call_operand.vmem [shape: bf16[128,512], index: 3, kind: input, shape index: {}]
  %s4 = inlined_call_operand.vmem [shape: f32[128,128], index: 4, kind: input, shape index: {}]
  %s5 = inlined_call_operand.vmem [shape: f32[1,128], index: 5, kind: input, shape index: {}]
  %s6 = inlined_call_operand.vmem [shape: f32[1,128], index: 6, kind: input, shape index: {}, may-alias: {6,7}]
  %s7 = inlined_call_operand.vmem [shape: f32[1,128], index: 7, kind: input, shape index: {}, may-alias: {6,7}]
  %s8 = inlined_call_operand.vmem [shape: f32[8,128], index: 8, kind: output, shape index: {0}]
  %s9 = inlined_call_operand.hbm [shape: f32[1,128], index: 9, kind: output, shape index: {1}]
  %s10 = inlined_call_operand.hbm [shape: f32[1,128], index: 10, kind: output, shape index: {2}]
  %11 = xla_tuple %s8, %s9, %s10
  %s12 = sld [smem:[#allocation0]]
  $region99: #{actor_critic_forward.1} parent=0
    _
  %s14 = ssub.s32 1, %s12
  %s15 = scalar_select 0, %s14, %s12
  $region1: #{actor_critic_forward.1} parent=0
    #allocation7 [shape = 'u8[512]{0}', space=vmem, size = 0x400, scoped, tag = 'output window, operand 1, single buffered']
    #allocation8 [shape = 's32[1]{0}', space=sflag, size = 0x4, scoped, tag = 'scoped memory for actor_critic_forward.1']
    #allocation9 [shape = 'u8[512]{0}', space=vmem, size = 0x400, scoped, tag = 'output window, operand 2, single buffered']
    #allocation10 [shape = 's32[1]{0}', space=sflag, size = 0x4, scoped, tag = 'scoped memory for actor_critic_forward.1']
    %16 = vsyncpa [#allocation8], 0
    %17 = vsyncpa [#allocation10], 0
    // Predicated region
    $region2: #{actor_critic_forward.1} parent=1 // pred_check
      _
    $region3: #{actor_critic_forward.1} parent=1 // pred_check_branch
      %19 = sbr.rel (0) target = $region5
    $region4: #{actor_critic_forward.1} parent=1 // pred_region
      _
    $region5: #{actor_critic_forward.1} parent=1 // pred_fallthru
      _
    // Predicated region
    $region6: #{actor_critic_forward.1} parent=1 // pred_check
      _
    $region7: #{actor_critic_forward.1} parent=1 // pred_check_branch
      %21 = sbr.rel (0) target = $region9
    $region8: #{actor_critic_forward.1} parent=1 // pred_region
      _
    $region9: #{actor_critic_forward.1} parent=1 // pred_fallthru
      _
    // Predicated region
    $region10: #{actor_critic_forward.1} parent=1 // pred_check
      _
    $region11: #{actor_critic_forward.1} parent=1 // pred_check_branch
      %23 = sbr.rel (0) target = $region13
    $region12: #{actor_critic_forward.1} parent=1 // pred_region
      _
    $region13: #{actor_critic_forward.1} parent=1 // pred_fallthru
      _
    // Predicated region
    $region14: #{actor_critic_forward.1} parent=1 // pred_check
      _
    $region15: #{actor_critic_forward.1} parent=1 // pred_check_branch
      %25 = sbr.rel (0) target = $region17
    $region16: #{actor_critic_forward.1} parent=1 // pred_region
      _
    $region17: #{actor_critic_forward.1} parent=1 // pred_fallthru
      _
    // Predicated region
    $region18: #{actor_critic_forward.1} parent=1 // pred_check
      _
    $region19: #{actor_critic_forward.1} parent=1 // pred_check_branch
      %27 = sbr.rel (0) target = $region21
    $region20: #{actor_critic_forward.1} parent=1 // pred_region
      _
    $region21: #{actor_critic_forward.1} parent=1 // pred_fallthru
      _
    // Predicated region
    $region22: #{actor_critic_forward.1} parent=1 // pred_check
      _
    $region23: #{actor_critic_forward.1} parent=1 // pred_check_branch
      %29 = sbr.rel (0) target = $region25
    $region24: #{actor_critic_forward.1} parent=1 // pred_region
      _
    $region25: #{actor_critic_forward.1} parent=1 // pred_fallthru
      _
    // Predicated region
    $region26: #{actor_critic_forward.1} parent=1 // pred_check
      _
    $region27: #{actor_critic_forward.1} parent=1 // pred_check_branch
      %31 = sbr.rel (0) target = $region29
    $region28: #{actor_critic_forward.1} parent=1 // pred_region
      loop: start=0, step=1, limit=1
      $region30: #{actor_critic_forward.1} parent=28 // loop_pre_header
        _
      $region31: #{actor_critic_forward.1} parent=28 // loop_header
        %s33 = sphi 0, %s37
        %p34 = scmp.ge.s32.totalorder %s33, 1
        %s38 = sphi %s4, %s4
        %s39 = sphi [#allocation4], [#allocation4]
      $region32: #{actor_critic_forward.1} parent=28 // loop_header_branch
        %36 = sbr.rel (%p34) target = $region36
      $region33: #{actor_critic_forward.1} parent=28 // loop_body
        %v40 = vld [vmem:[%s38] sm:$0xff]
        %41 = vst [vmem:[%s39] sm:$0xff] %v40
        %v42 = vld [vmem:[%s38 + $0x8] sm:$0xff]
        %43 = vst [vmem:[%s39 + $0x8] sm:$0xff] %v42
        %v44 = vld [vmem:[%s38 + $0x10] sm:$0xff]
        %45 = vst [vmem:[%s39 + $0x10] sm:$0xff] %v44
        %v46 = vld [vmem:[%s38 + $0x18] sm:$0xff]
        %47 = vst [vmem:[%s39 + $0x18] sm:$0xff] %v46
        %v48 = vld [vmem:[%s38 + $0x20] sm:$0xff]
        %49 = vst [vmem:[%s39 + $0x20] sm:$0xff] %v48
        %v50 = vld [vmem:[%s38 + $0x28] sm:$0xff]
        %51 = vst [vmem:[%s39 + $0x28] sm:$0xff] %v50
        %v52 = vld [vmem:[%s38 + $0x30] sm:$0xff]
        %53 = vst [vmem:[%s39 + $0x30] sm:$0xff] %v52
        %v54 = vld [vmem:[%s38 + $0x38] sm:$0xff]
        %55 = vst [vmem:[%s39 + $0x38] sm:$0xff] %v54
        %v56 = vld [vmem:[%s38 + $0x40] sm:$0xff]
        %57 = vst [vmem:[%s39 + $0x40] sm:$0xff] %v56
        %v58 = vld [vmem:[%s38 + $0x48] sm:$0xff]
        %59 = vst [vmem:[%s39 + $0x48] sm:$0xff] %v58
        %v60 = vld [vmem:[%s38 + $0x50] sm:$0xff]
        %61 = vst [vmem:[%s39 + $0x50] sm:$0xff] %v60
        %v62 = vld [vmem:[%s38 + $0x58] sm:$0xff]
        %63 = vst [vmem:[%s39 + $0x58] sm:$0xff] %v62
        %v64 = vld [vmem:[%s38 + $0x60] sm:$0xff]
        %65 = vst [vmem:[%s39 + $0x60] sm:$0xff] %v64
        %v66 = vld [vmem:[%s38 + $0x68] sm:$0xff]
        %67 = vst [vmem:[%s39 + $0x68] sm:$0xff] %v66
        %v68 = vld [vmem:[%s38 + $0x70] sm:$0xff]
        %69 = vst [vmem:[%s39 + $0x70] sm:$0xff] %v68
        %v70 = vld [vmem:[%s38 + $0x78] sm:$0xff]
        %71 = vst [vmem:[%s39 + $0x78] sm:$0xff] %v70
      $region34: #{actor_critic_forward.1} parent=28 // loop_footer
        %s37 = sadd.s32 1, %s33
      $region35: #{actor_critic_forward.1} parent=28 // loop_footer_branch
        %32 = sbr.rel target = $region31
      $region36: #{actor_critic_forward.1} parent=28 // loop_exit
        _
    $region29: #{actor_critic_forward.1} parent=1 // pred_fallthru
      _
    // Predicated region
    $region37: #{actor_critic_forward.1} parent=1 // pred_check
      _
    $region38: #{actor_critic_forward.1} parent=1 // pred_check_branch
      %73 = sbr.rel target = $region40
    $region39: #{actor_critic_forward.1} parent=1 // pred_region
      _
    $region40: #{actor_critic_forward.1} parent=1 // pred_fallthru
      _
    // Predicated region
    $region41: #{actor_critic_forward.1} parent=1 // pred_check
      _
    $region42: #{actor_critic_forward.1} parent=1 // pred_check_branch
      %76 = sbr.rel (0) target = $region44
    $region43: #{actor_critic_forward.1} parent=1 // pred_region
      %77 = vsyncadd [#allocation6], 2048
    $region44: #{actor_critic_forward.1} parent=1 // pred_fallthru
      _
    %s78 = scalar_lea.sflag [#allocation6], 1
    // Predicated region
    $region45: #{actor_critic_forward.1} parent=1 // pred_check
      _
    $region46: #{actor_critic_forward.1} parent=1 // pred_check_branch
      %80 = sbr.rel target = $region48
    $region47: #{actor_critic_forward.1} parent=1 // pred_region
      // Predicated region
      $region60: #{actor_critic_forward.1} parent=47 // pred_check
        _
      $region61: #{actor_critic_forward.1} parent=47 // pred_check_branch
        %96 = sbr.rel (0) target = $region63
      $region62: #{actor_critic_forward.1} parent=47 // pred_region
        %s98 = ssub.s32 2, 1
        loop: start=0, step=1, limit=1
        $region64: #{actor_critic_forward.1} parent=62 // loop_pre_header
          _
        $region65: #{actor_critic_forward.1} parent=62 // loop_header
          %s100 = sphi 0, %s104
          %p101 = scmp.ge.s32.totalorder %s100, 1
          %s105 = sphi %s5, %s5
          %s106 = sphi [#allocation5], [#allocation5]
        $region66: #{actor_critic_forward.1} parent=62 // loop_header_branch
          %103 = sbr.rel (%p101) target = $region70
        $region67: #{actor_critic_forward.1} parent=62 // loop_body
          %v107 = vld [vmem:[%s105] sm:%s98]
          %108 = vst [vmem:[%s106] sm:%s98] %v107
        $region68: #{actor_critic_forward.1} parent=62 // loop_footer
          %s104 = sadd.s32 1, %s100
        $region69: #{actor_critic_forward.1} parent=62 // loop_footer_branch
          %99 = sbr.rel target = $region65
        $region70: #{actor_critic_forward.1} parent=62 // loop_exit
          _
      $region63: #{actor_critic_forward.1} parent=47 // pred_fallthru
        _
    $region48: #{actor_critic_forward.1} parent=1 // pred_fallthru
      _
    // Predicated region
    $region49: #{actor_critic_forward.1} parent=1 // pred_check
      _
    $region50: #{actor_critic_forward.1} parent=1 // pred_check_branch
      %82 = sbr.rel (0) target = $region52
    $region51: #{actor_critic_forward.1} parent=1 // pred_region
      %s84 = ssub.s32 2, 1
      loop: start=0, step=1, limit=1
      $region53: #{actor_critic_forward.1} parent=51 // loop_pre_header
        _
      $region54: #{actor_critic_forward.1} parent=51 // loop_header
        %s86 = sphi 0, %s90
        %p87 = scmp.ge.s32.totalorder %s86, 1
        %s91 = sphi %s5, %s5
        %s92 = sphi [#allocation5], [#allocation5]
      $region55: #{actor_critic_forward.1} parent=51 // loop_header_branch
        %89 = sbr.rel (%p87) target = $region59
      $region56: #{actor_critic_forward.1} parent=51 // loop_body
        %v93 = vld [vmem:[%s91] sm:%s84]
        %94 = vst [vmem:[%s92] sm:%s84] %v93
      $region57: #{actor_critic_forward.1} parent=51 // loop_footer
        %s90 = sadd.s32 1, %s86
      $region58: #{actor_critic_forward.1} parent=51 // loop_footer_branch
        %85 = sbr.rel target = $region54
      $region59: #{actor_critic_forward.1} parent=51 // loop_exit
        _
    $region52: #{actor_critic_forward.1} parent=1 // pred_fallthru
      _
    // Predicated region
    $region71: #{actor_critic_forward.1} parent=1 // pred_check
      _
    $region72: #{actor_critic_forward.1} parent=1 // pred_check_branch
      %111 = sbr.rel (0) target = $region74
    $region73: #{actor_critic_forward.1} parent=1 // pred_region
      %112 = vsyncadd %s78, 16
    $region74: #{actor_critic_forward.1} parent=1 // pred_fallthru
      _
    %v113 = vld [vmem:[%s2] sm:$0xf]
    %v115 = vperm.slane %v113, 0
    %v116 = vperm.slane %v113, 1
    %v117 = vperm.slane %v113, 2
    %v118 = vperm.slane %v113, 3
    %v123 = vld [vmem:[%s0] sm:$0xff]
    %v124 = vld [vmem:[%s1] ss:$2 sm:$0xf]
    %126 = vset.pattern.permute.xlu0 0
    %127 = vperm.xlu0 %126, %v123
    %v128 = vpop.permute.xlu0 %127
    %v131 = vperm.slane %v124, 0
    %v132 = vperm.slane %v124, 1
    %v133 = vperm.slane %v124, 2
    %v134 = vperm.slane %v124, 3
    %v139 = vmul.f32 %v128, %v131
    %v140 = vmul.f32 %v128, %v132
    %v141 = vmul.f32 %v128, %v133
    %v142 = vmul.f32 %v128, %v134
    %v143 = vadd.f32 %v115, %v139
    %v144 = vadd.f32 %v116, %v140
    %v145 = vadd.f32 %v117, %v141
    %v146 = vadd.f32 %v118, %v142
    %s147 = scalar_lea.vmem %s1, 1
    %v148 = vld [vmem:[%s147] ss:$2 sm:$0xf]
    %149 = vset.pattern.permute.xlu0 1
    %150 = vperm.xlu0 %149, %v123
    %v151 = vpop.permute.xlu0 %150
    %v154 = vperm.slane %v148, 0
    %v155 = vperm.slane %v148, 1
    %v156 = vperm.slane %v148, 2
    %v157 = vperm.slane %v148, 3
    %v162 = vmul.f32 %v151, %v154
    %v163 = vmul.f32 %v151, %v155
    %v164 = vmul.f32 %v151, %v156
    %v165 = vmul.f32 %v151, %v157
    %v166 = vadd.f32 %v143, %v162
    %v167 = vadd.f32 %v144, %v163
    %v168 = vadd.f32 %v145, %v164
    %v169 = vadd.f32 %v146, %v165
    %170 = vst [vmem:[#allocation2] sm:$0xff] %v166
    %171 = vst [vmem:[#allocation2 + $0x8] sm:$0xff] %v167
    %172 = vst [vmem:[#allocation2 + $0x10] sm:$0xff] %v168
    %173 = vst [vmem:[#allocation2 + $0x18] sm:$0xff] %v169
    %v174 = vld [vmem:[%s6] sm:$0x1]
    %v175 = vld [vmem:[%s7] sm:$0x1]
    %s176 = smul.u32 0, 4
    %s177 = smul.addr %s176, 8
    %s178 = scalar_lea.vmem [#allocation2], %s177
    %v179 = vld [vmem:[%s178] ss:$8 sm:$0xf]
    %v180 = vpack.c.bf16 %v174, %v174
    %v181 = vld [vmem:[%s3] sm:$0xff]
    %v182 = vld [vmem:[%s3 + $0x8] sm:$0xff]
    %v183 = vld [vmem:[%s3 + $0x10] sm:$0xff]
    %v184 = vld [vmem:[%s3 + $0x18] sm:$0xff]
    %v185 = vld [vmem:[%s3 + $0x20] sm:$0xff]
    %v186 = vld [vmem:[%s3 + $0x28] sm:$0xff]
    %v187 = vld [vmem:[%s3 + $0x30] sm:$0xff]
    %v188 = vld [vmem:[%s3 + $0x38] sm:$0xff]
    %v189 = vld [vmem:[%s3 + $0x40] sm:$0xff]
    %v190 = vld [vmem:[%s3 + $0x48] sm:$0xff]
    %v191 = vld [vmem:[%s3 + $0x50] sm:$0xff]
    %v192 = vld [vmem:[%s3 + $0x58] sm:$0xff]
    %v193 = vld [vmem:[%s3 + $0x60] sm:$0xff]
    %v194 = vld [vmem:[%s3 + $0x68] sm:$0xff]
    %v195 = vld [vmem:[%s3 + $0x70] sm:$0xff]
    %v196 = vld [vmem:[%s3 + $0x78] sm:$0xff]
    %v197 = vld [vmem:[%s3 + $0x80] sm:$0xff]
    %v198 = vld [vmem:[%s3 + $0x88] sm:$0xff]
    %v199 = vld [vmem:[%s3 + $0x90] sm:$0xff]
    %v200 = vld [vmem:[%s3 + $0x98] sm:$0xff]
    %v201 = vld [vmem:[%s3 + $0xa0] sm:$0xff]
    %v202 = vld [vmem:[%s3 + $0xa8] sm:$0xff]
    %v203 = vld [vmem:[%s3 + $0xb0] sm:$0xff]
    %v204 = vld [vmem:[%s3 + $0xb8] sm:$0xff]
    %v205 = vld [vmem:[%s3 + $0xc0] sm:$0xff]
    %v206 = vld [vmem:[%s3 + $0xc8] sm:$0xff]
    %v207 = vld [vmem:[%s3 + $0xd0] sm:$0xff]
    %v208 = vld [vmem:[%s3 + $0xd8] sm:$0xff]
    %v209 = vld [vmem:[%s3 + $0xe0] sm:$0xff]
    %v210 = vld [vmem:[%s3 + $0xe8] sm:$0xff]
    %v211 = vld [vmem:[%s3 + $0xf0] sm:$0xff]
    %v212 = vld [vmem:[%s3 + $0xf8] sm:$0xff]
    %v245 = vunpack.c.l.b16 %v181
    %v246 = vunpack.c.h.b16 %v181
    %v247 = vunpack.c.l.b16 %v182
    %v248 = vunpack.c.h.b16 %v182
    %v249 = vunpack.c.l.b16 %v183
    %v250 = vunpack.c.h.b16 %v183
    %v251 = vunpack.c.l.b16 %v184
    %v252 = vunpack.c.h.b16 %v184
    %v253 = vunpack.c.l.b16 %v185
    %v254 = vunpack.c.h.b16 %v185
    %v255 = vunpack.c.l.b16 %v186
    %v256 = vunpack.c.h.b16 %v186
    %v257 = vunpack.c.l.b16 %v187
    %v258 = vunpack.c.h.b16 %v187
    %v259 = vunpack.c.l.b16 %v188
    %v260 = vunpack.c.h.b16 %v188
    %v261 = vunpack.c.l.b16 %v189
    %v262 = vunpack.c.h.b16 %v189
    %v263 = vunpack.c.l.b16 %v190
    %v264 = vunpack.c.h.b16 %v190
    %v265 = vunpack.c.l.b16 %v191
    %v266 = vunpack.c.h.b16 %v191
    %v267 = vunpack.c.l.b16 %v192
    %v268 = vunpack.c.h.b16 %v192
    %v269 = vunpack.c.l.b16 %v193
    %v270 = vunpack.c.h.b16 %v193
    %v271 = vunpack.c.l.b16 %v194
    %v272 = vunpack.c.h.b16 %v194
    %v273 = vunpack.c.l.b16 %v195
    %v274 = vunpack.c.h.b16 %v195
    %v275 = vunpack.c.l.b16 %v196
    %v276 = vunpack.c.h.b16 %v196
    %v277 = vunpack.c.l.b16 %v197
    %v278 = vunpack.c.h.b16 %v197
    %v279 = vunpack.c.l.b16 %v198
    %v280 = vunpack.c.h.b16 %v198
    %v281 = vunpack.c.l.b16 %v199
    %v282 = vunpack.c.h.b16 %v199
    %v283 = vunpack.c.l.b16 %v200
    %v284 = vunpack.c.h.b16 %v200
    %v285 = vunpack.c.l.b16 %v201
    %v286 = vunpack.c.h.b16 %v201
    %v287 = vunpack.c.l.b16 %v202
    %v288 = vunpack.c.h.b16 %v202
    %v289 = vunpack.c.l.b16 %v203
    %v290 = vunpack.c.h.b16 %v203
    %v291 = vunpack.c.l.b16 %v204
    %v292 = vunpack.c.h.b16 %v204
    %v293 = vunpack.c.l.b16 %v205
    %v294 = vunpack.c.h.b16 %v205
    %v295 = vunpack.c.l.b16 %v206
    %v296 = vunpack.c.h.b16 %v206
    %v297 = vunpack.c.l.b16 %v207
    %v298 = vunpack.c.h.b16 %v207
    %v299 = vunpack.c.l.b16 %v208
    %v300 = vunpack.c.h.b16 %v208
    %v301 = vunpack.c.l.b16 %v209
    %v302 = vunpack.c.h.b16 %v209
    %v303 = vunpack.c.l.b16 %v210
    %v304 = vunpack.c.h.b16 %v210
    %v305 = vunpack.c.l.b16 %v211
    %v306 = vunpack.c.h.b16 %v211
    %v307 = vunpack.c.l.b16 %v212
    %v308 = vunpack.c.h.b16 %v212
    %v309 = vpack.c.b16 %v249, %v245
    %v310 = vpack.c.b16 %v250, %v246
    %v311 = vpack.c.b16 %v251, %v247
    %v312 = vpack.c.b16 %v252, %v248
    %v313 = vpack.c.b16 %v257, %v253
    %v314 = vpack.c.b16 %v258, %v254
    %v315 = vpack.c.b16 %v259, %v255
    %v316 = vpack.c.b16 %v260, %v256
    %v317 = vpack.c.b16 %v265, %v261
    %v318 = vpack.c.b16 %v266, %v262
    %v319 = vpack.c.b16 %v267, %v263
    %v320 = vpack.c.b16 %v268, %v264
    %v321 = vpack.c.b16 %v273, %v269
    %v322 = vpack.c.b16 %v274, %v270
    %v323 = vpack.c.b16 %v275, %v271
    %v324 = vpack.c.b16 %v276, %v272
    %v325 = vpack.c.b16 %v281, %v277
    %v326 = vpack.c.b16 %v282, %v278
    %v327 = vpack.c.b16 %v283, %v279
    %v328 = vpack.c.b16 %v284, %v280
    %v329 = vpack.c.b16 %v289, %v285
    %v330 = vpack.c.b16 %v290, %v286
    %v331 = vpack.c.b16 %v291, %v287
    %v332 = vpack.c.b16 %v292, %v288
    %v333 = vpack.c.b16 %v297, %v293
    %v334 = vpack.c.b16 %v298, %v294
    %v335 = vpack.c.b16 %v299, %v295
    %v336 = vpack.c.b16 %v300, %v296
    %v337 = vpack.c.b16 %v305, %v301
    %v338 = vpack.c.b16 %v306, %v302
    %v339 = vpack.c.b16 %v307, %v303
    %v340 = vpack.c.b16 %v308, %v304
    %373 = vmatpush.bf16.msra.mxu0 %v337
    %374 = vmatpush.bf16.msra.mxu0 %v333
    %375 = vmatpush.bf16.msra.mxu0 %v329
    %376 = vmatpush.bf16.msra.mxu0 %v325
    %377 = vmatpush.bf16.msra.mxu0 %v321
    %378 = vmatpush.bf16.msra.mxu0 %v317
    %379 = vmatpush.bf16.msra.mxu0 %v313
    %380 = vmatpush.bf16.msra.mxu0 %v309
    %381 = vmatmul.bf16.gmra.mxu0 %v180
    %v382 = vpop.f32.mrf.mxu0
    %v383 = vadd.f32 0.0, %v382
    %v384 = vpop.f32.mrf.mxu0
    %385 = vdwg.mxu0
    %386 = vmatpush.bf16.msra.mxu0 %v338
    %387 = vmatpush.bf16.msra.mxu0 %v334
    %388 = vmatpush.bf16.msra.mxu0 %v330
    %389 = vmatpush.bf16.msra.mxu0 %v326
    %390 = vmatpush.bf16.msra.mxu0 %v322
    %391 = vmatpush.bf16.msra.mxu0 %v318
    %392 = vmatpush.bf16.msra.mxu0 %v314
    %393 = vmatpush.bf16.msra.mxu0 %v310
    %394 = vmatmul.bf16.gmra.mxu0 %v180
    %v395 = vpop.f32.mrf.mxu0
    %v396 = vadd.f32 0.0, %v395
    %v397 = vpop.f32.mrf.mxu0
    %398 = vdwg.mxu0
    %399 = vmatpush.bf16.msra.mxu0 %v339
    %400 = vmatpush.bf16.msra.mxu0 %v335
    %401 = vmatpush.bf16.msra.mxu0 %v331
    %402 = vmatpush.bf16.msra.mxu0 %v327
    %403 = vmatpush.bf16.msra.mxu0 %v323
    %404 = vmatpush.bf16.msra.mxu0 %v319
    %405 = vmatpush.bf16.msra.mxu0 %v315
    %406 = vmatpush.bf16.msra.mxu0 %v311
    %407 = vmatmul.bf16.gmra.mxu0 %v180
    %v408 = vpop.f32.mrf.mxu0
    %v409 = vadd.f32 0.0, %v408
    %v410 = vpop.f32.mrf.mxu0
    %411 = vdwg.mxu0
    %412 = vmatpush.bf16.msra.mxu0 %v340
    %413 = vmatpush.bf16.msra.mxu0 %v336
    %414 = vmatpush.bf16.msra.mxu0 %v332
    %415 = vmatpush.bf16.msra.mxu0 %v328
    %416 = vmatpush.bf16.msra.mxu0 %v324
    %417 = vmatpush.bf16.msra.mxu0 %v320
    %418 = vmatpush.bf16.msra.mxu0 %v316
    %419 = vmatpush.bf16.msra.mxu0 %v312
    %420 = vmatmul.bf16.gmra.mxu0 %v180
    %v421 = vpop.f32.mrf.mxu0
    %v422 = vadd.f32 0.0, %v421
    %v423 = vpop.f32.mrf.mxu0
    %424 = vdwg.mxu0
    %v429 = vrot.slane %v396, 7
    %v430 = vrot.slane %v409, 6
    %v431 = vrot.slane %v422, 5
    %vm432 = vcmask 1040384
    %v433 = vsel %vm432, %v383, %v429
    %vm434 = vcmask 1042434
    %v435 = vsel %vm434, %v430, %v431
    %vm436 = vcmask 1041408
    %v437 = vsel %vm436, %v433, %v435
    %v439 = vadd.f32 %v179, %v437
    %v440 = vxor.u32 %v439, 2147483648
    %v441 = vmul.f32 %v440, 1.442695
    %v442 = vpow.pop %v441
    %v443 = vadd.f32 %v442, 1.0
    %v444 = vrcp.pop %v443
    %v445 = vmul.f32 %v443, %v444
    %v446 = vsub.f32 1.0, %v445
    %v447 = vmul.f32 %v444, %v446
    %v448 = vadd.f32 %v444, %v447
    %vm449 = vweird.f32 %v443
    %vm450 = vweird.f32 %v444
    %vm451 = vmor %vm449, %vm450
    %v452 = vsel %vm451, %v444, %v448
    %v453 = vand.u32 2147483647, %v443
    %vm454 = vcmp.eq.f32.partialorder %v453, 8.507059e+37
    %v455 = vand.u32 %v443, 2147483648
    %v456 = vor.u32 1.1754944e-38, %v455
    %v457 = vsel %vm454, %v456, %v452
    %v458 = vmul.f32 1.0, %v457
    %v460 = vrot.slane %v439, 1
    %v462 = vxor.u32 %v460, 2147483648
    %v463 = vmul.f32 %v462, 1.442695
    %v464 = vpow.pop %v463
    %v465 = vadd.f32 %v464, 1.0
    %v466 = vrcp.pop %v465
    %v467 = vmul.f32 %v465, %v466
    %v468 = vsub.f32 1.0, %v467
    %v469 = vmul.f32 %v466, %v468
    %v470 = vadd.f32 %v466, %v469
    %vm471 = vweird.f32 %v465
    %vm472 = vweird.f32 %v466
    %vm473 = vmor %vm471, %vm472
    %v474 = vsel %vm473, %v466, %v470
    %v475 = vand.u32 2147483647, %v465
    %vm476 = vcmp.eq.f32.partialorder %v475, 8.507059e+37
    %v477 = vand.u32 %v465, 2147483648
    %v478 = vor.u32 1.1754944e-38, %v477
    %v479 = vsel %vm476, %v478, %v474
    %v480 = vmul.f32 1.0, %v479
    %v481 = vrot.slane %v439, 2
    %v483 = vtanh.pop %v481
    %v484 = vrot.slane %v439, 3
    %v486 = vxor.u32 %v484, 2147483648
    %v487 = vmul.f32 %v486, 1.442695
    %v488 = vpow.pop %v487
    %v489 = vadd.f32 %v488, 1.0
    %v490 = vrcp.pop %v489
    %v491 = vmul.f32 %v489, %v490
    %v492 = vsub.f32 1.0, %v491
    %v493 = vmul.f32 %v490, %v492
    %v494 = vadd.f32 %v490, %v493
    %vm495 = vweird.f32 %v489
    %vm496 = vweird.f32 %v490
    %vm497 = vmor %vm495, %vm496
    %v498 = vsel %vm497, %v490, %v494
    %v499 = vand.u32 2147483647, %v489
    %vm500 = vcmp.eq.f32.partialorder %v499, 8.507059e+37
    %v501 = vand.u32 %v489, 2147483648
    %v502 = vor.u32 1.1754944e-38, %v501
    %v503 = vsel %vm500, %v502, %v498
    %v504 = vmul.f32 1.0, %v503
    %v505 = vmul.f32 %v480, %v175
    %v506 = vmul.f32 %v458, %v483
    %v507 = vadd.f32 %v505, %v506
    %v508 = vtanh.pop %v507
    %v509 = vmul.f32 %v504, %v508
    %v510 = vmax.f32 %v509, 0.0
    %s511 = sadd.s32 0, 1
    %s512 = sshra.s32 %s511, 3
    %s513 = sand.u32 %s511, 7
    %s514 = sshra.s32 %s511, 3
    %s515 = sand.u32 %s511, 7
    %s516 = smul.u32 %s512, 4
    %s517 = smul.u32 %s516, 8
    %s518 = sadd.s32 %s517, %s515
    %s519 = scalar_lea.vmem [#allocation2], %s518
    %v520 = vld [vmem:[%s519] ss:$8 sm:$0xf]
    %v521 = vpack.c.bf16 %v509, %v509
    %522 = vmatpush.bf16.msra.mxu0 %v337
    %523 = vmatpush.bf16.msra.mxu0 %v333
    %524 = vmatpush.bf16.msra.mxu0 %v329
    %525 = vmatpush.bf16.msra.mxu0 %v325
    %526 = vmatpush.bf16.msra.mxu0 %v321
    %527 = vmatpush.bf16.msra.mxu0 %v317
    %528 = vmatpush.bf16.msra.mxu0 %v313
    %529 = vmatpush.bf16.msra.mxu0 %v309
    %530 = vmatmul.bf16.gmra.mxu0 %v521
    %v531 = vpop.f32.mrf.mxu0
    %v532 = vadd.f32 0.0, %v531
    %v533 = vpop.f32.mrf.mxu0
    %534 = vdwg.mxu0
    %535 = vmatpush.bf16.msra.mxu0 %v338
    %536 = vmatpush.bf16.msra.mxu0 %v334
    %537 = vmatpush.bf16.msra.mxu0 %v330
    %538 = vmatpush.bf16.msra.mxu0 %v326
    %539 = vmatpush.bf16.msra.mxu0 %v322
    %540 = vmatpush.bf16.msra.mxu0 %v318
    %541 = vmatpush.bf16.msra.mxu0 %v314
    %542 = vmatpush.bf16.msra.mxu0 %v310
    %543 = vmatmul.bf16.gmra.mxu0 %v521
    %v544 = vpop.f32.mrf.mxu0
    %v545 = vadd.f32 0.0, %v544
    %v546 = vpop.f32.mrf.mxu0
    %547 = vdwg.mxu0
    %548 = vmatpush.bf16.msra.mxu0 %v339
    %549 = vmatpush.bf16.msra.mxu0 %v335
    %550 = vmatpush.bf16.msra.mxu0 %v331
    %551 = vmatpush.bf16.msra.mxu0 %v327
    %552 = vmatpush.bf16.msra.mxu0 %v323
    %553 = vmatpush.bf16.msra.mxu0 %v319
    %554 = vmatpush.bf16.msra.mxu0 %v315
    %555 = vmatpush.bf16.msra.mxu0 %v311
    %556 = vmatmul.bf16.gmra.mxu0 %v521
    %v557 = vpop.f32.mrf.mxu0
    %v558 = vadd.f32 0.0, %v557
    %v559 = vpop.f32.mrf.mxu0
    %560 = vdwg.mxu0
    %561 = vmatpush.bf16.msra.mxu0 %v340
    %562 = vmatpush.bf16.msra.mxu0 %v336
    %563 = vmatpush.bf16.msra.mxu0 %v332
    %564 = vmatpush.bf16.msra.mxu0 %v328
    %565 = vmatpush.bf16.msra.mxu0 %v324
    %566 = vmatpush.bf16.msra.mxu0 %v320
    %567 = vmatpush.bf16.msra.mxu0 %v316
    %568 = vmatpush.bf16.msra.mxu0 %v312
    %569 = vmatmul.bf16.gmra.mxu0 %v521
    %v570 = vpop.f32.mrf.mxu0
    %v571 = vadd.f32 0.0, %v570
    %v572 = vpop.f32.mrf.mxu0
    %573 = vdwg.mxu0
    %v578 = vrot.slane %v545, 7
    %v579 = vrot.slane %v558, 6
    %v580 = vrot.slane %v571, 5
    %v581 = vsel %vm432, %v532, %v578
    %v582 = vsel %vm434, %v579, %v580
    %v583 = vsel %vm436, %v581, %v582
    %v585 = vadd.f32 %v520, %v583
    %v586 = vxor.u32 %v585, 2147483648
    %v587 = vmul.f32 %v586, 1.442695
    %v588 = vpow.pop %v587
    %v589 = vadd.f32 %v588, 1.0
    %v590 = vrcp.pop %v589
    %v591 = vmul.f32 %v589, %v590
    %v592 = vsub.f32 1.0, %v591
    %v593 = vmul.f32 %v590, %v592
    %v594 = vadd.f32 %v590, %v593
    %vm595 = vweird.f32 %v589
    %vm596 = vweird.f32 %v590
    %vm597 = vmor %vm595, %vm596
    %v598 = vsel %vm597, %v590, %v594
    %v599 = vand.u32 2147483647, %v589
    %vm600 = vcmp.eq.f32.partialorder %v599, 8.507059e+37
    %v601 = vand.u32 %v589, 2147483648
    %v602 = vor.u32 1.1754944e-38, %v601
    %v603 = vsel %vm600, %v602, %v598
    %v604 = vmul.f32 1.0, %v603
    %v606 = vrot.slane %v585, 1
    %v608 = vxor.u32 %v606, 2147483648
    %v609 = vmul.f32 %v608, 1.442695
    %v610 = vpow.pop %v609
    %v611 = vadd.f32 %v610, 1.0
    %v612 = vrcp.pop %v611
    %v613 = vmul.f32 %v611, %v612
    %v614 = vsub.f32 1.0, %v613
    %v615 = vmul.f32 %v612, %v614
    %v616 = vadd.f32 %v612, %v615
    %vm617 = vweird.f32 %v611
    %vm618 = vweird.f32 %v612
    %vm619 = vmor %vm617, %vm618
    %v620 = vsel %vm619, %v612, %v616
    %v621 = vand.u32 2147483647, %v611
    %vm622 = vcmp.eq.f32.partialorder %v621, 8.507059e+37
    %v623 = vand.u32 %v611, 2147483648
    %v624 = vor.u32 1.1754944e-38, %v623
    %v625 = vsel %vm622, %v624, %v620
    %v626 = vmul.f32 1.0, %v625
    %v627 = vrot.slane %v585, 2
    %v629 = vtanh.pop %v627
    %v630 = vrot.slane %v585, 3
    %v632 = vxor.u32 %v630, 2147483648
    %v633 = vmul.f32 %v632, 1.442695
    %v634 = vpow.pop %v633
    %v635 = vadd.f32 %v634, 1.0
    %v636 = vrcp.pop %v635
    %v637 = vmul.f32 %v635, %v636
    %v638 = vsub.f32 1.0, %v637
    %v639 = vmul.f32 %v636, %v638
    %v640 = vadd.f32 %v636, %v639
    %vm641 = vweird.f32 %v635
    %vm642 = vweird.f32 %v636
    %vm643 = vmor %vm641, %vm642
    %v644 = vsel %vm643, %v636, %v640
    %v645 = vand.u32 2147483647, %v635
    %vm646 = vcmp.eq.f32.partialorder %v645, 8.507059e+37
    %v647 = vand.u32 %v635, 2147483648
    %v648 = vor.u32 1.1754944e-38, %v647
    %v649 = vsel %vm646, %v648, %v644
    %v650 = vmul.f32 1.0, %v649
    %v651 = vmul.f32 %v626, %v507
    %v652 = vmul.f32 %v604, %v629
    %v653 = vadd.f32 %v651, %v652
    %v654 = vtanh.pop %v653
    %v655 = vmul.f32 %v650, %v654
    %v656 = vmax.f32 %v655, 0.0
    %s657 = sadd.s32 0, 2
    %s658 = sshra.s32 %s657, 3
    %s659 = sand.u32 %s657, 7
    %s660 = sshra.s32 %s657, 3
    %s661 = sand.u32 %s657, 7
    %s662 = smul.u32 %s658, 4
    %s663 = smul.u32 %s662, 8
    %s664 = sadd.s32 %s663, %s661
    %s665 = scalar_lea.vmem [#allocation2], %s664
    %v666 = vld [vmem:[%s665] ss:$8 sm:$0xf]
    %v667 = vpack.c.bf16 %v655, %v655
    %668 = vmatpush.bf16.msra.mxu0 %v337
    %669 = vmatpush.bf16.msra.mxu0 %v333
    %670 = vmatpush.bf16.msra.mxu0 %v329
    %671 = vmatpush.bf16.msra.mxu0 %v325
    %672 = vmatpush.bf16.msra.mxu0 %v321
    %673 = vmatpush.bf16.msra.mxu0 %v317
    %674 = vmatpush.bf16.msra.mxu0 %v313
    %675 = vmatpush.bf16.msra.mxu0 %v309
    %676 = vmatmul.bf16.gmra.mxu0 %v667
    %v677 = vpop.f32.mrf.mxu0
    %v678 = vadd.f32 0.0, %v677
    %v679 = vpop.f32.mrf.mxu0
    %680 = vdwg.mxu0
    %681 = vmatpush.bf16.msra.mxu0 %v338
    %682 = vmatpush.bf16.msra.mxu0 %v334
    %683 = vmatpush.bf16.msra.mxu0 %v330
    %684 = vmatpush.bf16.msra.mxu0 %v326
    %685 = vmatpush.bf16.msra.mxu0 %v322
    %686 = vmatpush.bf16.msra.mxu0 %v318
    %687 = vmatpush.bf16.msra.mxu0 %v314
    %688 = vmatpush.bf16.msra.mxu0 %v310
    %689 = vmatmul.bf16.gmra.mxu0 %v667
    %v690 = vpop.f32.mrf.mxu0
    %v691 = vadd.f32 0.0, %v690
    %v692 = vpop.f32.mrf.mxu0
    %693 = vdwg.mxu0
    %694 = vmatpush.bf16.msra.mxu0 %v339
    %695 = vmatpush.bf16.msra.mxu0 %v335
    %696 = vmatpush.bf16.msra.mxu0 %v331
    %697 = vmatpush.bf16.msra.mxu0 %v327
    %698 = vmatpush.bf16.msra.mxu0 %v323
    %699 = vmatpush.bf16.msra.mxu0 %v319
    %700 = vmatpush.bf16.msra.mxu0 %v315
    %701 = vmatpush.bf16.msra.mxu0 %v311
    %702 = vmatmul.bf16.gmra.mxu0 %v667
    %v703 = vpop.f32.mrf.mxu0
    %v704 = vadd.f32 0.0, %v703
    %v705 = vpop.f32.mrf.mxu0
    %706 = vdwg.mxu0
    %707 = vmatpush.bf16.msra.mxu0 %v340
    %708 = vmatpush.bf16.msra.mxu0 %v336
    %709 = vmatpush.bf16.msra.mxu0 %v332
    %710 = vmatpush.bf16.msra.mxu0 %v328
    %711 = vmatpush.bf16.msra.mxu0 %v324
    %712 = vmatpush.bf16.msra.mxu0 %v320
    %713 = vmatpush.bf16.msra.mxu0 %v316
    %714 = vmatpush.bf16.msra.mxu0 %v312
    %715 = vmatmul.bf16.gmra.mxu0 %v667
    %v716 = vpop.f32.mrf.mxu0
    %v717 = vadd.f32 0.0, %v716
    %v718 = vpop.f32.mrf.mxu0
    %719 = vdwg.mxu0
    %v724 = vrot.slane %v691, 7
    %v725 = vrot.slane %v704, 6
    %v726 = vrot.slane %v717, 5
    %v727 = vsel %vm432, %v678, %v724
    %v728 = vsel %vm434, %v725, %v726
    %v729 = vsel %vm436, %v727, %v728
    %v731 = vadd.f32 %v666, %v729
    %v732 = vxor.u32 %v731, 2147483648
    %v733 = vmul.f32 %v732, 1.442695
    %v734 = vpow.pop %v733
    %v735 = vadd.f32 %v734, 1.0
    %v736 = vrcp.pop %v735
    %v737 = vmul.f32 %v735, %v736
    %v738 = vsub.f32 1.0, %v737
    %v739 = vmul.f32 %v736, %v738
    %v740 = vadd.f32 %v736, %v739
    %vm741 = vweird.f32 %v735
    %vm742 = vweird.f32 %v736
    %vm743 = vmor %vm741, %vm742
    %v744 = vsel %vm743, %v736, %v740
    %v745 = vand.u32 2147483647, %v735
    %vm746 = vcmp.eq.f32.partialorder %v745, 8.507059e+37
    %v747 = vand.u32 %v735, 2147483648
    %v748 = vor.u32 1.1754944e-38, %v747
    %v749 = vsel %vm746, %v748, %v744
    %v750 = vmul.f32 1.0, %v749
    %v752 = vrot.slane %v731, 1
    %v754 = vxor.u32 %v752, 2147483648
    %v755 = vmul.f32 %v754, 1.442695
    %v756 = vpow.pop %v755
    %v757 = vadd.f32 %v756, 1.0
    %v758 = vrcp.pop %v757
    %v759 = vmul.f32 %v757, %v758
    %v760 = vsub.f32 1.0, %v759
    %v761 = vmul.f32 %v758, %v760
    %v762 = vadd.f32 %v758, %v761
    %vm763 = vweird.f32 %v757
    %vm764 = vweird.f32 %v758
    %vm765 = vmor %vm763, %vm764
    %v766 = vsel %vm765, %v758, %v762
    %v767 = vand.u32 2147483647, %v757
    %vm768 = vcmp.eq.f32.partialorder %v767, 8.507059e+37
    %v769 = vand.u32 %v757, 2147483648
    %v770 = vor.u32 1.1754944e-38, %v769
    %v771 = vsel %vm768, %v770, %v766
    %v772 = vmul.f32 1.0, %v771
    %v773 = vrot.slane %v731, 2
    %v775 = vtanh.pop %v773
    %v776 = vrot.slane %v731, 3
    %v778 = vxor.u32 %v776, 2147483648
    %v779 = vmul.f32 %v778, 1.442695
    %v780 = vpow.pop %v779
    %v781 = vadd.f32 %v780, 1.0
    %v782 = vrcp.pop %v781
    %v783 = vmul.f32 %v781, %v782
    %v784 = vsub.f32 1.0, %v783
    %v785 = vmul.f32 %v782, %v784
    %v786 = vadd.f32 %v782, %v785
    %vm787 = vweird.f32 %v781
    %vm788 = vweird.f32 %v782
    %vm789 = vmor %vm787, %vm788
    %v790 = vsel %vm789, %v782, %v786
    %v791 = vand.u32 2147483647, %v781
    %vm792 = vcmp.eq.f32.partialorder %v791, 8.507059e+37
    %v793 = vand.u32 %v781, 2147483648
    %v794 = vor.u32 1.1754944e-38, %v793
    %v795 = vsel %vm792, %v794, %v790
    %v796 = vmul.f32 1.0, %v795
    %v797 = vmul.f32 %v772, %v653
    %v798 = vmul.f32 %v750, %v775
    %v799 = vadd.f32 %v797, %v798
    %v800 = vtanh.pop %v799
    %v801 = vmul.f32 %v796, %v800
    %v802 = vmax.f32 %v801, 0.0
    %s803 = sadd.s32 0, 3
    %s804 = sshra.s32 %s803, 3
    %s805 = sand.u32 %s803, 7
    %s806 = sshra.s32 %s803, 3
    %s807 = sand.u32 %s803, 7
    %s808 = smul.u32 %s804, 4
    %s809 = smul.u32 %s808, 8
    %s810 = sadd.s32 %s809, %s807
    %s811 = scalar_lea.vmem [#allocation2], %s810
    %v812 = vld [vmem:[%s811] ss:$8 sm:$0xf]
    %v813 = vpack.c.bf16 %v801, %v801
    %814 = vmatpush.bf16.msra.mxu0 %v337
    %815 = vmatpush.bf16.msra.mxu0 %v333
    %816 = vmatpush.bf16.msra.mxu0 %v329
    %817 = vmatpush.bf16.msra.mxu0 %v325
    %818 = vmatpush.bf16.msra.mxu0 %v321
    %819 = vmatpush.bf16.msra.mxu0 %v317
    %820 = vmatpush.bf16.msra.mxu0 %v313
    %821 = vmatpush.bf16.msra.mxu0 %v309
    %822 = vmatmul.bf16.gmra.mxu0 %v813
    %v823 = vpop.f32.mrf.mxu0
    %v824 = vadd.f32 0.0, %v823
    %v825 = vpop.f32.mrf.mxu0
    %826 = vdwg.mxu0
    %827 = vmatpush.bf16.msra.mxu0 %v338
    %828 = vmatpush.bf16.msra.mxu0 %v334
    %829 = vmatpush.bf16.msra.mxu0 %v330
    %830 = vmatpush.bf16.msra.mxu0 %v326
    %831 = vmatpush.bf16.msra.mxu0 %v322
    %832 = vmatpush.bf16.msra.mxu0 %v318
    %833 = vmatpush.bf16.msra.mxu0 %v314
    %834 = vmatpush.bf16.msra.mxu0 %v310
    %835 = vmatmul.bf16.gmra.mxu0 %v813
    %v836 = vpop.f32.mrf.mxu0
    %v837 = vadd.f32 0.0, %v836
    %v838 = vpop.f32.mrf.mxu0
    %839 = vdwg.mxu0
    %840 = vmatpush.bf16.msra.mxu0 %v339
    %841 = vmatpush.bf16.msra.mxu0 %v335
    %842 = vmatpush.bf16.msra.mxu0 %v331
    %843 = vmatpush.bf16.msra.mxu0 %v327
    %844 = vmatpush.bf16.msra.mxu0 %v323
    %845 = vmatpush.bf16.msra.mxu0 %v319
    %846 = vmatpush.bf16.msra.mxu0 %v315
    %847 = vmatpush.bf16.msra.mxu0 %v311
    %848 = vmatmul.bf16.gmra.mxu0 %v813
    %v849 = vpop.f32.mrf.mxu0
    %v850 = vadd.f32 0.0, %v849
    %v851 = vpop.f32.mrf.mxu0
    %852 = vdwg.mxu0
    %853 = vmatpush.bf16.msra.mxu0 %v340
    %854 = vmatpush.bf16.msra.mxu0 %v336
    %855 = vmatpush.bf16.msra.mxu0 %v332
    %856 = vmatpush.bf16.msra.mxu0 %v328
    %857 = vmatpush.bf16.msra.mxu0 %v324
    %858 = vmatpush.bf16.msra.mxu0 %v320
    %859 = vmatpush.bf16.msra.mxu0 %v316
    %860 = vmatpush.bf16.msra.mxu0 %v312
    %861 = vmatmul.bf16.gmra.mxu0 %v813
    %v862 = vpop.f32.mrf.mxu0
    %v863 = vadd.f32 0.0, %v862
    %v864 = vpop.f32.mrf.mxu0
    %865 = vdwg.mxu0
    %v870 = vrot.slane %v837, 7
    %v871 = vrot.slane %v850, 6
    %v872 = vrot.slane %v863, 5
    %v873 = vsel %vm432, %v824, %v870
    %v874 = vsel %vm434, %v871, %v872
    %v875 = vsel %vm436, %v873, %v874
    %v877 = vadd.f32 %v812, %v875
    %v878 = vxor.u32 %v877, 2147483648
    %v879 = vmul.f32 %v878, 1.442695
    %v880 = vpow.pop %v879
    %v881 = vadd.f32 %v880, 1.0
    %v882 = vrcp.pop %v881
    %v883 = vmul.f32 %v881, %v882
    %v884 = vsub.f32 1.0, %v883
    %v885 = vmul.f32 %v882, %v884
    %v886 = vadd.f32 %v882, %v885
    %vm887 = vweird.f32 %v881
    %vm888 = vweird.f32 %v882
    %vm889 = vmor %vm887, %vm888
    %v890 = vsel %vm889, %v882, %v886
    %v891 = vand.u32 2147483647, %v881
    %vm892 = vcmp.eq.f32.partialorder %v891, 8.507059e+37
    %v893 = vand.u32 %v881, 2147483648
    %v894 = vor.u32 1.1754944e-38, %v893
    %v895 = vsel %vm892, %v894, %v890
    %v896 = vmul.f32 1.0, %v895
    %v898 = vrot.slane %v877, 1
    %v900 = vxor.u32 %v898, 2147483648
    %v901 = vmul.f32 %v900, 1.442695
    %v902 = vpow.pop %v901
    %v903 = vadd.f32 %v902, 1.0
    %v904 = vrcp.pop %v903
    %v905 = vmul.f32 %v903, %v904
    %v906 = vsub.f32 1.0, %v905
    %v907 = vmul.f32 %v904, %v906
    %v908 = vadd.f32 %v904, %v907
    %vm909 = vweird.f32 %v903
    %vm910 = vweird.f32 %v904
    %vm911 = vmor %vm909, %vm910
    %v912 = vsel %vm911, %v904, %v908
    %v913 = vand.u32 2147483647, %v903
    %vm914 = vcmp.eq.f32.partialorder %v913, 8.507059e+37
    %v915 = vand.u32 %v903, 2147483648
    %v916 = vor.u32 1.1754944e-38, %v915
    %v917 = vsel %vm914, %v916, %v912
    %v918 = vmul.f32 1.0, %v917
    %v919 = vrot.slane %v877, 2
    %v921 = vtanh.pop %v919
    %v922 = vrot.slane %v877, 3
    %v924 = vxor.u32 %v922, 2147483648
    %v925 = vmul.f32 %v924, 1.442695
    %v926 = vpow.pop %v925
    %v927 = vadd.f32 %v926, 1.0
    %v928 = vrcp.pop %v927
    %v929 = vmul.f32 %v927, %v928
    %v930 = vsub.f32 1.0, %v929
    %v931 = vmul.f32 %v928, %v930
    %v932 = vadd.f32 %v928, %v931
    %vm933 = vweird.f32 %v927
    %vm934 = vweird.f32 %v928
    %vm935 = vmor %vm933, %vm934
    %v936 = vsel %vm935, %v928, %v932
    %v937 = vand.u32 2147483647, %v927
    %vm938 = vcmp.eq.f32.partialorder %v937, 8.507059e+37
    %v939 = vand.u32 %v927, 2147483648
    %v940 = vor.u32 1.1754944e-38, %v939
    %v941 = vsel %vm938, %v940, %v936
    %v942 = vmul.f32 1.0, %v941
    %v943 = vmul.f32 %v918, %v799
    %v944 = vmul.f32 %v896, %v921
    %v945 = vadd.f32 %v943, %v944
    %v946 = vtanh.pop %v945
    %v947 = vmul.f32 %v942, %v946
    %v948 = vmax.f32 %v947, 0.0
    %s949 = sadd.s32 0, 4
    %s950 = sshra.s32 %s949, 3
    %s951 = sand.u32 %s949, 7
    %s952 = sshra.s32 %s949, 3
    %s953 = sand.u32 %s949, 7
    %s954 = smul.u32 %s950, 4
    %s955 = smul.u32 %s954, 8
    %s956 = sadd.s32 %s955, %s953
    %s957 = scalar_lea.vmem [#allocation2], %s956
    %v958 = vld [vmem:[%s957] ss:$8 sm:$0xf]
    %v959 = vpack.c.bf16 %v947, %v947
    %960 = vmatpush.bf16.msra.mxu0 %v337
    %961 = vmatpush.bf16.msra.mxu0 %v333
    %962 = vmatpush.bf16.msra.mxu0 %v329
    %963 = vmatpush.bf16.msra.mxu0 %v325
    %964 = vmatpush.bf16.msra.mxu0 %v321
    %965 = vmatpush.bf16.msra.mxu0 %v317
    %966 = vmatpush.bf16.msra.mxu0 %v313
    %967 = vmatpush.bf16.msra.mxu0 %v309
    %968 = vmatmul.bf16.gmra.mxu0 %v959
    %v969 = vpop.f32.mrf.mxu0
    %v970 = vadd.f32 0.0, %v969
    %v971 = vpop.f32.mrf.mxu0
    %972 = vdwg.mxu0
    %973 = vmatpush.bf16.msra.mxu0 %v338
    %974 = vmatpush.bf16.msra.mxu0 %v334
    %975 = vmatpush.bf16.msra.mxu0 %v330
    %976 = vmatpush.bf16.msra.mxu0 %v326
    %977 = vmatpush.bf16.msra.mxu0 %v322
    %978 = vmatpush.bf16.msra.mxu0 %v318
    %979 = vmatpush.bf16.msra.mxu0 %v314
    %980 = vmatpush.bf16.msra.mxu0 %v310
    %981 = vmatmul.bf16.gmra.mxu0 %v959
    %v982 = vpop.f32.mrf.mxu0
    %v983 = vadd.f32 0.0, %v982
    %v984 = vpop.f32.mrf.mxu0
    %985 = vdwg.mxu0
    %986 = vmatpush.bf16.msra.mxu0 %v339
    %987 = vmatpush.bf16.msra.mxu0 %v335
    %988 = vmatpush.bf16.msra.mxu0 %v331
    %989 = vmatpush.bf16.msra.mxu0 %v327
    %990 = vmatpush.bf16.msra.mxu0 %v323
    %991 = vmatpush.bf16.msra.mxu0 %v319
    %992 = vmatpush.bf16.msra.mxu0 %v315
    %993 = vmatpush.bf16.msra.mxu0 %v311
    %994 = vmatmul.bf16.gmra.mxu0 %v959
    %v995 = vpop.f32.mrf.mxu0
    %v996 = vadd.f32 0.0, %v995
    %v997 = vpop.f32.mrf.mxu0
    %998 = vdwg.mxu0
    %999 = vmatpush.bf16.msra.mxu0 %v340
    %1000 = vmatpush.bf16.msra.mxu0 %v336
    %1001 = vmatpush.bf16.msra.mxu0 %v332
    %1002 = vmatpush.bf16.msra.mxu0 %v328
    %1003 = vmatpush.bf16.msra.mxu0 %v324
    %1004 = vmatpush.bf16.msra.mxu0 %v320
    %1005 = vmatpush.bf16.msra.mxu0 %v316
    %1006 = vmatpush.bf16.msra.mxu0 %v312
    %1007 = vmatmul.bf16.gmra.mxu0 %v959
    %v1008 = vpop.f32.mrf.mxu0
    %v1009 = vadd.f32 0.0, %v1008
    %v1010 = vpop.f32.mrf.mxu0
    %1011 = vdwg.mxu0
    %v1016 = vrot.slane %v983, 7
    %v1017 = vrot.slane %v996, 6
    %v1018 = vrot.slane %v1009, 5
    %v1019 = vsel %vm432, %v970, %v1016
    %v1020 = vsel %vm434, %v1017, %v1018
    %v1021 = vsel %vm436, %v1019, %v1020
    %v1023 = vadd.f32 %v958, %v1021
    %v1024 = vxor.u32 %v1023, 2147483648
    %v1025 = vmul.f32 %v1024, 1.442695
    %v1026 = vpow.pop %v1025
    %v1027 = vadd.f32 %v1026, 1.0
    %v1028 = vrcp.pop %v1027
    %v1029 = vmul.f32 %v1027, %v1028
    %v1030 = vsub.f32 1.0, %v1029
    %v1031 = vmul.f32 %v1028, %v1030
    %v1032 = vadd.f32 %v1028, %v1031
    %vm1033 = vweird.f32 %v1027
    %vm1034 = vweird.f32 %v1028
    %vm1035 = vmor %vm1033, %vm1034
    %v1036 = vsel %vm1035, %v1028, %v1032
    %v1037 = vand.u32 2147483647, %v1027
    %vm1038 = vcmp.eq.f32.partialorder %v1037, 8.507059e+37
    %v1039 = vand.u32 %v1027, 2147483648
    %v1040 = vor.u32 1.1754944e-38, %v1039
    %v1041 = vsel %vm1038, %v1040, %v1036
    %v1042 = vmul.f32 1.0, %v1041
    %v1044 = vrot.slane %v1023, 1
    %v1046 = vxor.u32 %v1044, 2147483648
    %v1047 = vmul.f32 %v1046, 1.442695
    %v1048 = vpow.pop %v1047
    %v1049 = vadd.f32 %v1048, 1.0
    %v1050 = vrcp.pop %v1049
    %v1051 = vmul.f32 %v1049, %v1050
    %v1052 = vsub.f32 1.0, %v1051
    %v1053 = vmul.f32 %v1050, %v1052
    %v1054 = vadd.f32 %v1050, %v1053
    %vm1055 = vweird.f32 %v1049
    %vm1056 = vweird.f32 %v1050
    %vm1057 = vmor %vm1055, %vm1056
    %v1058 = vsel %vm1057, %v1050, %v1054
    %v1059 = vand.u32 2147483647, %v1049
    %vm1060 = vcmp.eq.f32.partialorder %v1059, 8.507059e+37
    %v1061 = vand.u32 %v1049, 2147483648
    %v1062 = vor.u32 1.1754944e-38, %v1061
    %v1063 = vsel %vm1060, %v1062, %v1058
    %v1064 = vmul.f32 1.0, %v1063
    %v1065 = vrot.slane %v1023, 2
    %v1067 = vtanh.pop %v1065
    %v1068 = vrot.slane %v1023, 3
    %v1070 = vxor.u32 %v1068, 2147483648
    %v1071 = vmul.f32 %v1070, 1.442695
    %v1072 = vpow.pop %v1071
    %v1073 = vadd.f32 %v1072, 1.0
    %v1074 = vrcp.pop %v1073
    %v1075 = vmul.f32 %v1073, %v1074
    %v1076 = vsub.f32 1.0, %v1075
    %v1077 = vmul.f32 %v1074, %v1076
    %v1078 = vadd.f32 %v1074, %v1077
    %vm1079 = vweird.f32 %v1073
    %vm1080 = vweird.f32 %v1074
    %vm1081 = vmor %vm1079, %vm1080
    %v1082 = vsel %vm1081, %v1074, %v1078
    %v1083 = vand.u32 2147483647, %v1073
    %vm1084 = vcmp.eq.f32.partialorder %v1083, 8.507059e+37
    %v1085 = vand.u32 %v1073, 2147483648
    %v1086 = vor.u32 1.1754944e-38, %v1085
    %v1087 = vsel %vm1084, %v1086, %v1082
    %v1088 = vmul.f32 1.0, %v1087
    %v1089 = vmul.f32 %v1064, %v945
    %v1090 = vmul.f32 %v1042, %v1067
    %v1091 = vadd.f32 %v1089, %v1090
    %v1092 = vtanh.pop %v1091
    %v1093 = vmul.f32 %v1088, %v1092
    %v1094 = vmax.f32 %v1093, 0.0
    %s1095 = sadd.s32 0, 5
    %s1096 = sshra.s32 %s1095, 3
    %s1097 = sand.u32 %s1095, 7
    %s1098 = sshra.s32 %s1095, 3
    %s1099 = sand.u32 %s1095, 7
    %s1100 = smul.u32 %s1096, 4
    %s1101 = smul.u32 %s1100, 8
    %s1102 = sadd.s32 %s1101, %s1099
    %s1103 = scalar_lea.vmem [#allocation2], %s1102
    %v1104 = vld [vmem:[%s1103] ss:$8 sm:$0xf]
    %v1105 = vpack.c.bf16 %v1093, %v1093
    %1106 = vmatpush.bf16.msra.mxu0 %v337
    %1107 = vmatpush.bf16.msra.mxu0 %v333
    %1108 = vmatpush.bf16.msra.mxu0 %v329
    %1109 = vmatpush.bf16.msra.mxu0 %v325
    %1110 = vmatpush.bf16.msra.mxu0 %v321
    %1111 = vmatpush.bf16.msra.mxu0 %v317
    %1112 = vmatpush.bf16.msra.mxu0 %v313
    %1113 = vmatpush.bf16.msra.mxu0 %v309
    %1114 = vmatmul.bf16.gmra.mxu0 %v1105
    %v1115 = vpop.f32.mrf.mxu0
    %v1116 = vadd.f32 0.0, %v1115
    %v1117 = vpop.f32.mrf.mxu0
    %1118 = vdwg.mxu0
    %1119 = vmatpush.bf16.msra.mxu0 %v338
    %1120 = vmatpush.bf16.msra.mxu0 %v334
    %1121 = vmatpush.bf16.msra.mxu0 %v330
    %1122 = vmatpush.bf16.msra.mxu0 %v326
    %1123 = vmatpush.bf16.msra.mxu0 %v322
    %1124 = vmatpush.bf16.msra.mxu0 %v318
    %1125 = vmatpush.bf16.msra.mxu0 %v314
    %1126 = vmatpush.bf16.msra.mxu0 %v310
    %1127 = vmatmul.bf16.gmra.mxu0 %v1105
    %v1128 = vpop.f32.mrf.mxu0
    %v1129 = vadd.f32 0.0, %v1128
    %v1130 = vpop.f32.mrf.mxu0
    %1131 = vdwg.mxu0
    %1132 = vmatpush.bf16.msra.mxu0 %v339
    %1133 = vmatpush.bf16.msra.mxu0 %v335
    %1134 = vmatpush.bf16.msra.mxu0 %v331
    %1135 = vmatpush.bf16.msra.mxu0 %v327
    %1136 = vmatpush.bf16.msra.mxu0 %v323
    %1137 = vmatpush.bf16.msra.mxu0 %v319
    %1138 = vmatpush.bf16.msra.mxu0 %v315
    %1139 = vmatpush.bf16.msra.mxu0 %v311
    %1140 = vmatmul.bf16.gmra.mxu0 %v1105
    %v1141 = vpop.f32.mrf.mxu0
    %v1142 = vadd.f32 0.0, %v1141
    %v1143 = vpop.f32.mrf.mxu0
    %1144 = vdwg.mxu0
    %1145 = vmatpush.bf16.msra.mxu0 %v340
    %1146 = vmatpush.bf16.msra.mxu0 %v336
    %1147 = vmatpush.bf16.msra.mxu0 %v332
    %1148 = vmatpush.bf16.msra.mxu0 %v328
    %1149 = vmatpush.bf16.msra.mxu0 %v324
    %1150 = vmatpush.bf16.msra.mxu0 %v320
    %1151 = vmatpush.bf16.msra.mxu0 %v316
    %1152 = vmatpush.bf16.msra.mxu0 %v312
    %1153 = vmatmul.bf16.gmra.mxu0 %v1105
    %v1154 = vpop.f32.mrf.mxu0
    %v1155 = vadd.f32 0.0, %v1154
    %v1156 = vpop.f32.mrf.mxu0
    %1157 = vdwg.mxu0
    %v1162 = vrot.slane %v1129, 7
    %v1163 = vrot.slane %v1142, 6
    %v1164 = vrot.slane %v1155, 5
    %v1165 = vsel %vm432, %v1116, %v1162
    %v1166 = vsel %vm434, %v1163, %v1164
    %v1167 = vsel %vm436, %v1165, %v1166
    %v1169 = vadd.f32 %v1104, %v1167
    %v1170 = vxor.u32 %v1169, 2147483648
    %v1171 = vmul.f32 %v1170, 1.442695
    %v1172 = vpow.pop %v1171
    %v1173 = vadd.f32 %v1172, 1.0
    %v1174 = vrcp.pop %v1173
    %v1175 = vmul.f32 %v1173, %v1174
    %v1176 = vsub.f32 1.0, %v1175
    %v1177 = vmul.f32 %v1174, %v1176
    %v1178 = vadd.f32 %v1174, %v1177
    %vm1179 = vweird.f32 %v1173
    %vm1180 = vweird.f32 %v1174
    %vm1181 = vmor %vm1179, %vm1180
    %v1182 = vsel %vm1181, %v1174, %v1178
    %v1183 = vand.u32 2147483647, %v1173
    %vm1184 = vcmp.eq.f32.partialorder %v1183, 8.507059e+37
    %v1185 = vand.u32 %v1173, 2147483648
    %v1186 = vor.u32 1.1754944e-38, %v1185
    %v1187 = vsel %vm1184, %v1186, %v1182
    %v1188 = vmul.f32 1.0, %v1187
    %v1190 = vrot.slane %v1169, 1
    %v1192 = vxor.u32 %v1190, 2147483648
    %v1193 = vmul.f32 %v1192, 1.442695
    %v1194 = vpow.pop %v1193
    %v1195 = vadd.f32 %v1194, 1.0
    %v1196 = vrcp.pop %v1195
    %v1197 = vmul.f32 %v1195, %v1196
    %v1198 = vsub.f32 1.0, %v1197
    %v1199 = vmul.f32 %v1196, %v1198
    %v1200 = vadd.f32 %v1196, %v1199
    %vm1201 = vweird.f32 %v1195
    %vm1202 = vweird.f32 %v1196
    %vm1203 = vmor %vm1201, %vm1202
    %v1204 = vsel %vm1203, %v1196, %v1200
    %v1205 = vand.u32 2147483647, %v1195
    %vm1206 = vcmp.eq.f32.partialorder %v1205, 8.507059e+37
    %v1207 = vand.u32 %v1195, 2147483648
    %v1208 = vor.u32 1.1754944e-38, %v1207
    %v1209 = vsel %vm1206, %v1208, %v1204
    %v1210 = vmul.f32 1.0, %v1209
    %v1211 = vrot.slane %v1169, 2
    %v1213 = vtanh.pop %v1211
    %v1214 = vrot.slane %v1169, 3
    %v1216 = vxor.u32 %v1214, 2147483648
    %v1217 = vmul.f32 %v1216, 1.442695
    %v1218 = vpow.pop %v1217
    %v1219 = vadd.f32 %v1218, 1.0
    %v1220 = vrcp.pop %v1219
    %v1221 = vmul.f32 %v1219, %v1220
    %v1222 = vsub.f32 1.0, %v1221
    %v1223 = vmul.f32 %v1220, %v1222
    %v1224 = vadd.f32 %v1220, %v1223
    %vm1225 = vweird.f32 %v1219
    %vm1226 = vweird.f32 %v1220
    %vm1227 = vmor %vm1225, %vm1226
    %v1228 = vsel %vm1227, %v1220, %v1224
    %v1229 = vand.u32 2147483647, %v1219
    %vm1230 = vcmp.eq.f32.partialorder %v1229, 8.507059e+37
    %v1231 = vand.u32 %v1219, 2147483648
    %v1232 = vor.u32 1.1754944e-38, %v1231
    %v1233 = vsel %vm1230, %v1232, %v1228
    %v1234 = vmul.f32 1.0, %v1233
    %v1235 = vmul.f32 %v1210, %v1091
    %v1236 = vmul.f32 %v1188, %v1213
    %v1237 = vadd.f32 %v1235, %v1236
    %v1238 = vtanh.pop %v1237
    %v1239 = vmul.f32 %v1234, %v1238
    %v1240 = vmax.f32 %v1239, 0.0
    %s1241 = sadd.s32 0, 6
    %s1242 = sshra.s32 %s1241, 3
    %s1243 = sand.u32 %s1241, 7
    %s1244 = sshra.s32 %s1241, 3
    %s1245 = sand.u32 %s1241, 7
    %s1246 = smul.u32 %s1242, 4
    %s1247 = smul.u32 %s1246, 8
    %s1248 = sadd.s32 %s1247, %s1245
    %s1249 = scalar_lea.vmem [#allocation2], %s1248
    %v1250 = vld [vmem:[%s1249] ss:$8 sm:$0xf]
    %v1251 = vpack.c.bf16 %v1239, %v1239
    %1252 = vmatpush.bf16.msra.mxu0 %v337
    %1253 = vmatpush.bf16.msra.mxu0 %v333
    %1254 = vmatpush.bf16.msra.mxu0 %v329
    %1255 = vmatpush.bf16.msra.mxu0 %v325
    %1256 = vmatpush.bf16.msra.mxu0 %v321
    %1257 = vmatpush.bf16.msra.mxu0 %v317
    %1258 = vmatpush.bf16.msra.mxu0 %v313
    %1259 = vmatpush.bf16.msra.mxu0 %v309
    %1260 = vmatmul.bf16.gmra.mxu0 %v1251
    %v1261 = vpop.f32.mrf.mxu0
    %v1262 = vadd.f32 0.0, %v1261
    %v1263 = vpop.f32.mrf.mxu0
    %1264 = vdwg.mxu0
    %1265 = vmatpush.bf16.msra.mxu0 %v338
    %1266 = vmatpush.bf16.msra.mxu0 %v334
    %1267 = vmatpush.bf16.msra.mxu0 %v330
    %1268 = vmatpush.bf16.msra.mxu0 %v326
    %1269 = vmatpush.bf16.msra.mxu0 %v322
    %1270 = vmatpush.bf16.msra.mxu0 %v318
    %1271 = vmatpush.bf16.msra.mxu0 %v314
    %1272 = vmatpush.bf16.msra.mxu0 %v310
    %1273 = vmatmul.bf16.gmra.mxu0 %v1251
    %v1274 = vpop.f32.mrf.mxu0
    %v1275 = vadd.f32 0.0, %v1274
    %v1276 = vpop.f32.mrf.mxu0
    %1277 = vdwg.mxu0
    %1278 = vmatpush.bf16.msra.mxu0 %v339
    %1279 = vmatpush.bf16.msra.mxu0 %v335
    %1280 = vmatpush.bf16.msra.mxu0 %v331
    %1281 = vmatpush.bf16.msra.mxu0 %v327
    %1282 = vmatpush.bf16.msra.mxu0 %v323
    %1283 = vmatpush.bf16.msra.mxu0 %v319
    %1284 = vmatpush.bf16.msra.mxu0 %v315
    %1285 = vmatpush.bf16.msra.mxu0 %v311
    %1286 = vmatmul.bf16.gmra.mxu0 %v1251
    %v1287 = vpop.f32.mrf.mxu0
    %v1288 = vadd.f32 0.0, %v1287
    %v1289 = vpop.f32.mrf.mxu0
    %1290 = vdwg.mxu0
    %1291 = vmatpush.bf16.msra.mxu0 %v340
    %1292 = vmatpush.bf16.msra.mxu0 %v336
    %1293 = vmatpush.bf16.msra.mxu0 %v332
    %1294 = vmatpush.bf16.msra.mxu0 %v328
    %1295 = vmatpush.bf16.msra.mxu0 %v324
    %1296 = vmatpush.bf16.msra.mxu0 %v320
    %1297 = vmatpush.bf16.msra.mxu0 %v316
    %1298 = vmatpush.bf16.msra.mxu0 %v312
    %1299 = vmatmul.bf16.gmra.mxu0 %v1251
    %v1300 = vpop.f32.mrf.mxu0
    %v1301 = vadd.f32 0.0, %v1300
    %v1302 = vpop.f32.mrf.mxu0
    %1303 = vdwg.mxu0
    %v1308 = vrot.slane %v1275, 7
    %v1309 = vrot.slane %v1288, 6
    %v1310 = vrot.slane %v1301, 5
    %v1311 = vsel %vm432, %v1262, %v1308
    %v1312 = vsel %vm434, %v1309, %v1310
    %v1313 = vsel %vm436, %v1311, %v1312
    %v1315 = vadd.f32 %v1250, %v1313
    %v1316 = vxor.u32 %v1315, 2147483648
    %v1317 = vmul.f32 %v1316, 1.442695
    %v1318 = vpow.pop %v1317
    %v1319 = vadd.f32 %v1318, 1.0
    %v1320 = vrcp.pop %v1319
    %v1321 = vmul.f32 %v1319, %v1320
    %v1322 = vsub.f32 1.0, %v1321
    %v1323 = vmul.f32 %v1320, %v1322
    %v1324 = vadd.f32 %v1320, %v1323
    %vm1325 = vweird.f32 %v1319
    %vm1326 = vweird.f32 %v1320
    %vm1327 = vmor %vm1325, %vm1326
    %v1328 = vsel %vm1327, %v1320, %v1324
    %v1329 = vand.u32 2147483647, %v1319
    %vm1330 = vcmp.eq.f32.partialorder %v1329, 8.507059e+37
    %v1331 = vand.u32 %v1319, 2147483648
    %v1332 = vor.u32 1.1754944e-38, %v1331
    %v1333 = vsel %vm1330, %v1332, %v1328
    %v1334 = vmul.f32 1.0, %v1333
    %v1336 = vrot.slane %v1315, 1
    %v1338 = vxor.u32 %v1336, 2147483648
    %v1339 = vmul.f32 %v1338, 1.442695
    %v1340 = vpow.pop %v1339
    %v1341 = vadd.f32 %v1340, 1.0
    %v1342 = vrcp.pop %v1341
    %v1343 = vmul.f32 %v1341, %v1342
    %v1344 = vsub.f32 1.0, %v1343
    %v1345 = vmul.f32 %v1342, %v1344
    %v1346 = vadd.f32 %v1342, %v1345
    %vm1347 = vweird.f32 %v1341
    %vm1348 = vweird.f32 %v1342
    %vm1349 = vmor %vm1347, %vm1348
    %v1350 = vsel %vm1349, %v1342, %v1346
    %v1351 = vand.u32 2147483647, %v1341
    %vm1352 = vcmp.eq.f32.partialorder %v1351, 8.507059e+37
    %v1353 = vand.u32 %v1341, 2147483648
    %v1354 = vor.u32 1.1754944e-38, %v1353
    %v1355 = vsel %vm1352, %v1354, %v1350
    %v1356 = vmul.f32 1.0, %v1355
    %v1357 = vrot.slane %v1315, 2
    %v1359 = vtanh.pop %v1357
    %v1360 = vrot.slane %v1315, 3
    %v1362 = vxor.u32 %v1360, 2147483648
    %v1363 = vmul.f32 %v1362, 1.442695
    %v1364 = vpow.pop %v1363
    %v1365 = vadd.f32 %v1364, 1.0
    %v1366 = vrcp.pop %v1365
    %v1367 = vmul.f32 %v1365, %v1366
    %v1368 = vsub.f32 1.0, %v1367
    %v1369 = vmul.f32 %v1366, %v1368
    %v1370 = vadd.f32 %v1366, %v1369
    %vm1371 = vweird.f32 %v1365
    %vm1372 = vweird.f32 %v1366
    %vm1373 = vmor %vm1371, %vm1372
    %v1374 = vsel %vm1373, %v1366, %v1370
    %v1375 = vand.u32 2147483647, %v1365
    %vm1376 = vcmp.eq.f32.partialorder %v1375, 8.507059e+37
    %v1377 = vand.u32 %v1365, 2147483648
    %v1378 = vor.u32 1.1754944e-38, %v1377
    %v1379 = vsel %vm1376, %v1378, %v1374
    %v1380 = vmul.f32 1.0, %v1379
    %v1381 = vmul.f32 %v1356, %v1237
    %v1382 = vmul.f32 %v1334, %v1359
    %v1383 = vadd.f32 %v1381, %v1382
    %v1384 = vtanh.pop %v1383
    %v1385 = vmul.f32 %v1380, %v1384
    %v1386 = vmax.f32 %v1385, 0.0
    %s1387 = sadd.s32 0, 7
    %s1388 = sshra.s32 %s1387, 3
    %s1389 = sand.u32 %s1387, 7
    %s1390 = sshra.s32 %s1387, 3
    %s1391 = sand.u32 %s1387, 7
    %s1392 = smul.u32 %s1388, 4
    %s1393 = smul.u32 %s1392, 8
    %s1394 = sadd.s32 %s1393, %s1391
    %s1395 = scalar_lea.vmem [#allocation2], %s1394
    %v1396 = vld [vmem:[%s1395] ss:$8 sm:$0xf]
    %v1397 = vpack.c.bf16 %v1385, %v1385
    %1398 = vmatpush.bf16.msra.mxu0 %v337
    %1399 = vmatpush.bf16.msra.mxu0 %v333
    %1400 = vmatpush.bf16.msra.mxu0 %v329
    %1401 = vmatpush.bf16.msra.mxu0 %v325
    %1402 = vmatpush.bf16.msra.mxu0 %v321
    %1403 = vmatpush.bf16.msra.mxu0 %v317
    %1404 = vmatpush.bf16.msra.mxu0 %v313
    %1405 = vmatpush.bf16.msra.mxu0 %v309
    %1406 = vmatmul.bf16.gmra.mxu0 %v1397
    %v1407 = vpop.f32.mrf.mxu0
    %v1408 = vadd.f32 0.0, %v1407
    %v1409 = vpop.f32.mrf.mxu0
    %1410 = vdwg.mxu0
    %1411 = vmatpush.bf16.msra.mxu0 %v338
    %1412 = vmatpush.bf16.msra.mxu0 %v334
    %1413 = vmatpush.bf16.msra.mxu0 %v330
    %1414 = vmatpush.bf16.msra.mxu0 %v326
    %1415 = vmatpush.bf16.msra.mxu0 %v322
    %1416 = vmatpush.bf16.msra.mxu0 %v318
    %1417 = vmatpush.bf16.msra.mxu0 %v314
    %1418 = vmatpush.bf16.msra.mxu0 %v310
    %1419 = vmatmul.bf16.gmra.mxu0 %v1397
    %v1420 = vpop.f32.mrf.mxu0
    %v1421 = vadd.f32 0.0, %v1420
    %v1422 = vpop.f32.mrf.mxu0
    %1423 = vdwg.mxu0
    %1424 = vmatpush.bf16.msra.mxu0 %v339
    %1425 = vmatpush.bf16.msra.mxu0 %v335
    %1426 = vmatpush.bf16.msra.mxu0 %v331
    %1427 = vmatpush.bf16.msra.mxu0 %v327
    %1428 = vmatpush.bf16.msra.mxu0 %v323
    %1429 = vmatpush.bf16.msra.mxu0 %v319
    %1430 = vmatpush.bf16.msra.mxu0 %v315
    %1431 = vmatpush.bf16.msra.mxu0 %v311
    %1432 = vmatmul.bf16.gmra.mxu0 %v1397
    %v1433 = vpop.f32.mrf.mxu0
    %v1434 = vadd.f32 0.0, %v1433
    %v1435 = vpop.f32.mrf.mxu0
    %1436 = vdwg.mxu0
    %1437 = vmatpush.bf16.msra.mxu0 %v340
    %1438 = vmatpush.bf16.msra.mxu0 %v336
    %1439 = vmatpush.bf16.msra.mxu0 %v332
    %1440 = vmatpush.bf16.msra.mxu0 %v328
    %1441 = vmatpush.bf16.msra.mxu0 %v324
    %1442 = vmatpush.bf16.msra.mxu0 %v320
    %1443 = vmatpush.bf16.msra.mxu0 %v316
    %1444 = vmatpush.bf16.msra.mxu0 %v312
    %1445 = vmatmul.bf16.gmra.mxu0 %v1397
    %v1446 = vpop.f32.mrf.mxu0
    %v1447 = vadd.f32 0.0, %v1446
    %v1448 = vpop.f32.mrf.mxu0
    %1449 = vdwg.mxu0
    %v1454 = vrot.slane %v1421, 7
    %v1455 = vrot.slane %v1434, 6
    %v1456 = vrot.slane %v1447, 5
    %v1457 = vsel %vm432, %v1408, %v1454
    %v1458 = vsel %vm434, %v1455, %v1456
    %v1459 = vsel %vm436, %v1457, %v1458
    %v1461 = vadd.f32 %v1396, %v1459
    %v1462 = vxor.u32 %v1461, 2147483648
    %v1463 = vmul.f32 %v1462, 1.442695
    %v1464 = vpow.pop %v1463
    %v1465 = vadd.f32 %v1464, 1.0
    %v1466 = vrcp.pop %v1465
    %v1467 = vmul.f32 %v1465, %v1466
    %v1468 = vsub.f32 1.0, %v1467
    %v1469 = vmul.f32 %v1466, %v1468
    %v1470 = vadd.f32 %v1466, %v1469
    %vm1471 = vweird.f32 %v1465
    %vm1472 = vweird.f32 %v1466
    %vm1473 = vmor %vm1471, %vm1472
    %v1474 = vsel %vm1473, %v1466, %v1470
    %v1475 = vand.u32 2147483647, %v1465
    %vm1476 = vcmp.eq.f32.partialorder %v1475, 8.507059e+37
    %v1477 = vand.u32 %v1465, 2147483648
    %v1478 = vor.u32 1.1754944e-38, %v1477
    %v1479 = vsel %vm1476, %v1478, %v1474
    %v1480 = vmul.f32 1.0, %v1479
    %v1482 = vrot.slane %v1461, 1
    %v1484 = vxor.u32 %v1482, 2147483648
    %v1485 = vmul.f32 %v1484, 1.442695
    %v1486 = vpow.pop %v1485
    %v1487 = vadd.f32 %v1486, 1.0
    %v1488 = vrcp.pop %v1487
    %v1489 = vmul.f32 %v1487, %v1488
    %v1490 = vsub.f32 1.0, %v1489
    %v1491 = vmul.f32 %v1488, %v1490
    %v1492 = vadd.f32 %v1488, %v1491
    %vm1493 = vweird.f32 %v1487
    %vm1494 = vweird.f32 %v1488
    %vm1495 = vmor %vm1493, %vm1494
    %v1496 = vsel %vm1495, %v1488, %v1492
    %v1497 = vand.u32 2147483647, %v1487
    %vm1498 = vcmp.eq.f32.partialorder %v1497, 8.507059e+37
    %v1499 = vand.u32 %v1487, 2147483648
    %v1500 = vor.u32 1.1754944e-38, %v1499
    %v1501 = vsel %vm1498, %v1500, %v1496
    %v1502 = vmul.f32 1.0, %v1501
    %v1503 = vrot.slane %v1461, 2
    %v1505 = vtanh.pop %v1503
    %v1506 = vrot.slane %v1461, 3
    %v1508 = vxor.u32 %v1506, 2147483648
    %v1509 = vmul.f32 %v1508, 1.442695
    %v1510 = vpow.pop %v1509
    %v1511 = vadd.f32 %v1510, 1.0
    %v1512 = vrcp.pop %v1511
    %v1513 = vmul.f32 %v1511, %v1512
    %v1514 = vsub.f32 1.0, %v1513
    %v1515 = vmul.f32 %v1512, %v1514
    %v1516 = vadd.f32 %v1512, %v1515
    %vm1517 = vweird.f32 %v1511
    %vm1518 = vweird.f32 %v1512
    %vm1519 = vmor %vm1517, %vm1518
    %v1520 = vsel %vm1519, %v1512, %v1516
    %v1521 = vand.u32 2147483647, %v1511
    %vm1522 = vcmp.eq.f32.partialorder %v1521, 8.507059e+37
    %v1523 = vand.u32 %v1511, 2147483648
    %v1524 = vor.u32 1.1754944e-38, %v1523
    %v1525 = vsel %vm1522, %v1524, %v1520
    %v1526 = vmul.f32 1.0, %v1525
    %v1527 = vmul.f32 %v1502, %v1383
    %v1528 = vmul.f32 %v1480, %v1505
    %v1529 = vadd.f32 %v1527, %v1528
    %v1530 = vtanh.pop %v1529
    %v1531 = vmul.f32 %v1526, %v1530
    %v1532 = vmax.f32 %v1531, 0.0
    %v1534 = vperm.slane %v656, 0
    %v1537 = vperm.slane %v802, 0
    %v1540 = vperm.slane %v948, 0
    %v1543 = vperm.slane %v1094, 0
    %v1546 = vperm.slane %v1240, 0
    %v1549 = vperm.slane %v1386, 0
    %v1552 = vperm.slane %v1532, 0
    %v1554 = vsel %vm432, %v510, %v1534
    %v1555 = vsel %vm436, %v1554, %v1537
    %vm1556 = vcmask 1042432
    %v1557 = vsel %vm1556, %v1555, %v1540
    %vm1558 = vcmask 1043456
    %v1559 = vsel %vm1558, %v1557, %v1543
    %vm1560 = vcmask 1044480
    %v1561 = vsel %vm1560, %v1559, %v1546
    %vm1562 = vcmask 1045504
    %v1563 = vsel %vm1562, %v1561, %v1549
    %vm1564 = vcmask 1046528
    %v1565 = vsel %vm1564, %v1563, %v1552
    %1566 = vst [vmem:[#allocation3] sm:$0xff] %v1565
    %1567 = vst [vmem:[#allocation7] sm:$0x1] %v1531
    %1568 = vst [vmem:[#allocation9] sm:$0x1] %v1529
    %s1569 = smul.u32 128, 1
    %s1570 = sshll.u32 %s1569, 4
    %1571 = dma.done [#allocation6], %s1570
    %s1572 = smul.u32 1, 1
    %s1573 = sshll.u32 %s1572, 4
    %1574 = dma.done %s78, %s1573
    %v1575 = vld [vmem:[#allocation3] sm:$0xff]
    %v1576 = vld [vmem:[#allocation4] sm:$0xff]
    %v1577 = vld [vmem:[#allocation4 + $0x8] sm:$0xff]
    %v1578 = vld [vmem:[#allocation4 + $0x10] sm:$0xff]
    %v1579 = vld [vmem:[#allocation4 + $0x18] sm:$0xff]
    %v1580 = vld [vmem:[#allocation4 + $0x20] sm:$0xff]
    %v1581 = vld [vmem:[#allocation4 + $0x28] sm:$0xff]
    %v1582 = vld [vmem:[#allocation4 + $0x30] sm:$0xff]
    %v1583 = vld [vmem:[#allocation4 + $0x38] sm:$0xff]
    %v1584 = vld [vmem:[#allocation4 + $0x40] sm:$0xff]
    %v1585 = vld [vmem:[#allocation4 + $0x48] sm:$0xff]
    %v1586 = vld [vmem:[#allocation4 + $0x50] sm:$0xff]
    %v1587 = vld [vmem:[#allocation4 + $0x58] sm:$0xff]
    %v1588 = vld [vmem:[#allocation4 + $0x60] sm:$0xff]
    %v1589 = vld [vmem:[#allocation4 + $0x68] sm:$0xff]
    %v1590 = vld [vmem:[#allocation4 + $0x70] sm:$0xff]
    %v1591 = vld [vmem:[#allocation4 + $0x78] sm:$0xff]
    %v1592 = vld [vmem:[#allocation5] sm:$0x1]
    %v1594 = vperm.slane %v1592, 0
    %1596 = vmatpush.msra.mxu0 %v1591
    %1597 = vmatpush.msra.mxu0 %v1590
    %1598 = vmatpush.msra.mxu0 %v1589
    %1599 = vmatpush.msra.mxu0 %v1588
    %1600 = vmatpush.msra.mxu0 %v1587
    %1601 = vmatpush.msra.mxu0 %v1586
    %1602 = vmatpush.msra.mxu0 %v1585
    %1603 = vmatpush.msra.mxu0 %v1584
    %1604 = vmatpush.msra.mxu0 %v1583
    %1605 = vmatpush.msra.mxu0 %v1582
    %1606 = vmatpush.msra.mxu0 %v1581
    %1607 = vmatpush.msra.mxu0 %v1580
    %1608 = vmatpush.msra.mxu0 %v1579
    %1609 = vmatpush.msra.mxu0 %v1578
    %1610 = vmatpush.msra.mxu0 %v1577
    %1611 = vmatpush.msra.mxu0 %v1576
    %1612 = vmatmul.f32.gmra.mxu0 %v1575
    %v1613 = vpop.f32.mrf.mxu0
    %v1614 = vadd.f32 %v1594, %v1613
    %1615 = vdwg.mxu0
    %v1616 = vlaneseq
    %v1617 = vand.u32 %v1616, 127
    %vm1618 = vcmp.lt.s32.totalorder %v1617, 2
    %v1619 = vsel %vm1618, %v1614, -1e+30
    %1620 = vmax.xlane.f32.xlu0 %v1619
    %v1621 = vpop.xlane.xlu0 %1620
    %v1622 = vsub.f32 %v1619, %v1621
    %v1623 = vmul.f32 %v1622, 1.442695
    %v1624 = vpow.pop %v1623
    %v1625 = vsel %vm1618, %v1624, 0.0
    %1626 = vadd.xlane.f32.xlu0 %v1625
    %v1627 = vpop.xlane.xlu0 %1626
    %v1628 = vrcp.pop %v1627
    %v1629 = vmul.f32 %v1627, %v1628
    %v1630 = vsub.f32 1.0, %v1629
    %v1631 = vmul.f32 %v1628, %v1630
    %v1632 = vadd.f32 %v1628, %v1631
    %vm1633 = vweird.f32 %v1627
    %vm1634 = vweird.f32 %v1628
    %vm1635 = vmor %vm1633, %vm1634
    %v1636 = vsel %vm1635, %v1628, %v1632
    %v1637 = vand.u32 2147483647, %v1627
    %vm1638 = vcmp.eq.f32.partialorder %v1637, 8.507059e+37
    %v1639 = vand.u32 %v1627, 2147483648
    %v1640 = vor.u32 1.1754944e-38, %v1639
    %v1641 = vsel %vm1638, %v1640, %v1636
    %v1642 = vmul.f32 %v1625, %v1641
    %v1643 = vsel %vm1618, %v1642, %v1614
    %1644 = vst [vmem:[%s8] sm:$0xff] %v1643
    // Predicated region
    $region75: #{actor_critic_forward.1} parent=1 // pred_check
      _
    $region76: #{actor_critic_forward.1} parent=1 // pred_check_branch
      %1646 = sbr.rel (0) target = $region78
    $region77: #{actor_critic_forward.1} parent=1 // pred_region
      _
    $region78: #{actor_critic_forward.1} parent=1 // pred_fallthru
      _
    // Predicated region
    $region79: #{actor_critic_forward.1} parent=1 // pred_check
      _
    $region80: #{actor_critic_forward.1} parent=1 // pred_check_branch
      %1648 = sbr.rel (0) target = $region82
    $region81: #{actor_critic_forward.1} parent=1 // pred_region
      %1650 = vsyncadd [#allocation8], 0
      %s1652 = sshll.u32 [#allocation7], 4
      %s1653 = int_to_ptr.vmem [resolvable:$true] %s1652
      %s1654 = sshll.u32 %s9, 4
      %s1655 = int_to_ptr.hbm [resolvable:$true] %s1654
      %1657 = dma.vmem_to_hbm [thread:$0]  %s1653, 16, %s1655, [#allocation8]
    $region82: #{actor_critic_forward.1} parent=1 // pred_fallthru
      _
    // Predicated region
    $region83: #{actor_critic_forward.1} parent=1 // pred_check
      _
    $region84: #{actor_critic_forward.1} parent=1 // pred_check_branch
      %1659 = sbr.rel (0) target = $region86
    $region85: #{actor_critic_forward.1} parent=1 // pred_region
      %1661 = vsyncadd [#allocation10], 0
      %s1663 = sshll.u32 [#allocation9], 4
      %s1664 = int_to_ptr.vmem [resolvable:$true] %s1663
      %s1665 = sshll.u32 %s10, 4
      %s1666 = int_to_ptr.hbm [resolvable:$true] %s1665
      %1668 = dma.vmem_to_hbm [thread:$0]  %s1664, 16, %s1666, [#allocation10]
    $region86: #{actor_critic_forward.1} parent=1 // pred_fallthru
      _
    // Predicated region
    $region87: #{actor_critic_forward.1} parent=1 // pred_check
      _
    $region88: #{actor_critic_forward.1} parent=1 // pred_check_branch
      %1670 = sbr.rel (0) target = $region90
    $region89: #{actor_critic_forward.1} parent=1 // pred_region
      _
    $region90: #{actor_critic_forward.1} parent=1 // pred_fallthru
      _
    // Predicated region
    $region91: #{actor_critic_forward.1} parent=1 // pred_check
      _
    $region92: #{actor_critic_forward.1} parent=1 // pred_check_branch
      %1672 = sbr.rel (0) target = $region94
    $region93: #{actor_critic_forward.1} parent=1 // pred_region
      %1674 = dma.done [#allocation8], 16
    $region94: #{actor_critic_forward.1} parent=1 // pred_fallthru
      _
    // Predicated region
    $region95: #{actor_critic_forward.1} parent=1 // pred_check
      _
    $region96: #{actor_critic_forward.1} parent=1 // pred_check_branch
      %1676 = sbr.rel (0) target = $region98
    $region97: #{actor_critic_forward.1} parent=1 // pred_region
      %1678 = dma.done [#allocation10], 16
    $region98: #{actor_critic_forward.1} parent=1 // pred_fallthru
      _
    %1679 = vsyncpa [#allocation8], 1
    %1680 = vsyncpa [#allocation10], 1
  %1681 = vsyncmov [#allocation6]
  %s1682 = vpop.sfrf %1681
  %p1683 = scmp.eq.s32.totalorder %s1682, 0
  %p1684 = pneg %p1683
  %1686 = shalt.err (%p1684)
  %s1687 = scalar_lea.sflag [#allocation6], 1
  %1688 = vsyncmov %s1687
  %s1689 = vpop.sfrf %1688
  %p1690 = scmp.eq.s32.totalorder %s1689, 0
  %p1691 = pneg %p1690
  %1693 = shalt.err (%p1691)

</llo_original>
